<compile_context>
chip_gen: v6e
topology: v6e:2x2x1
jax: 0.10.0
libtpu: 0.0.40
codegen_flags: <defaults>
</compile_context>

<pallas_src>
import jax
import jax.numpy as jnp
from jax.experimental import pallas as pl
from jax.experimental.pallas import tpu as pltpu

IN_FEATURES = 28 * 28   # 784
HIDDEN = 512
OUT_FEATURES = 10
OUT_PADDED = 128        # lane-dense padded logits width
TB_MAX = 1024           # max batch tile (fits v7x's 64 MiB VMEM comfortably)
NEG_INF = -1e30


def _round_up(x, m):
    return ((x + m - 1) // m) * m


def _mlp_kernel(x_ref, w1_ref, b1_ref, w2_ref, b2_ref, w3_ref, b3_ref, o_ref):
    # fc1 + ReLU  (bf16 MXU inputs, f32 accumulation and elementwise math)
    h1 = jnp.dot(x_ref[...], w1_ref[...], preferred_element_type=jnp.float32)
    h1 = jnp.maximum(h1 + b1_ref[...], 0.0).astype(jnp.bfloat16)

    # fc2 + ReLU
    h2 = jnp.dot(h1, w2_ref[...], preferred_element_type=jnp.float32)
    h2 = jnp.maximum(h2 + b2_ref[...], 0.0).astype(jnp.bfloat16)

    # fc4 (N padded to 128 so the output store is full-vreg, not vst.msk).
    # Padded w3 columns are zero and the padded bias lanes hold -1e30, so the
    # padding is already masked out of the softmax normalization — no per-step
    # iota/compare/select needed.
    logits = jnp.dot(h2, w3_ref[...], preferred_element_type=jnp.float32)
    logits = logits + b3_ref[...]

    # Numerically stable log_softmax along the feature (lane) axis, in f32.
    m = jnp.max(logits, axis=-1, keepdims=True)
    shifted = logits - m
    lse = jnp.log(jnp.sum(jnp.exp(shifted), axis=-1, keepdims=True))
    o_ref[...] = (shifted - lse).astype(o_ref.dtype)


def _pick_tiling(batch):
    """Tight batch tiling: >=2 (even) steps when possible, TB <= TB_MAX, 8-row aligned."""
    b8 = _round_up(max(batch, 1), 8)
    n_steps = pl.cdiv(b8, TB_MAX)
    if n_steps == 1 and b8 >= 16:
        n_steps = 2               # engage both v7x TensorCores on mid-size batches
    if n_steps > 1 and n_steps % 2 == 1:
        n_steps += 1              # even step count splits cleanly across 2 cores
    tb = _round_up(pl.cdiv(b8, n_steps), 8)   # tight: padding waste < 8 rows/step
    bp = tb * n_steps
    return tb, bp, n_steps


def net_forward(x, params):
    """x: (B, 1, 28, 28) or (B, 784). Returns (B, 10) f32 log-probs."""
    w1, b1, w2, b2, w3, b3 = params
    x2d = x.reshape(-1, IN_FEATURES)
    B = x2d.shape[0]

    TB, Bp, n_steps = _pick_tiling(B)

    xb = x2d.astype(jnp.bfloat16)
    if Bp != B:
        xb = jnp.pad(xb, ((0, Bp - B), (0, 0)))  # padded rows are harmless

    # bf16 matmul inputs; f32 biases. fc4 weight zero-padded to 128 cols; the
    # fc4 bias carries -1e30 in the padded lanes (mask baked in, f32 only).
    w1b = w1.astype(jnp.bfloat16)
    w2b = w2.astype(jnp.bfloat16)
    w3p = jnp.zeros((HIDDEN, OUT_PADDED), jnp.bfloat16)
    w3p = w3p.at[:, :OUT_FEATURES].set(w3.astype(jnp.bfloat16))
    b3p = jnp.full((1, OUT_PADDED), NEG_INF, jnp.float32)
    b3p = b3p.at[:, :OUT_FEATURES].set(b3.astype(jnp.float32))

    grid = (n_steps,)
    resident = lambda i: (0, 0)  # weights/biases: same block every step

    flops = 2 * Bp * (IN_FEATURES * HIDDEN + HIDDEN * HIDDEN + HIDDEN * OUT_PADDED)
    bytes_accessed = (
        xb.size * 2
        + (w1b.size + w2b.size + w3p.size) * 2
        + (b1.size + b2.size + b3p.size) * 4
        + Bp * OUT_PADDED * 4
    )

    out = pl.pallas_call(
        _mlp_kernel,
        out_shape=jax.ShapeDtypeStruct((Bp, OUT_PADDED), jnp.float32),
        grid=grid,
        in_specs=[
            pl.BlockSpec((TB, IN_FEATURES), lambda i: (i, 0)),
            pl.BlockSpec((IN_FEATURES, HIDDEN), resident),
            pl.BlockSpec((1, HIDDEN), resident),
            pl.BlockSpec((HIDDEN, HIDDEN), resident),
            pl.BlockSpec((1, HIDDEN), resident),
            pl.BlockSpec((HIDDEN, OUT_PADDED), resident),
            pl.BlockSpec((1, OUT_PADDED), resident),
        ],
        out_specs=pl.BlockSpec((TB, OUT_PADDED), lambda i: (i, 0)),
        compiler_params=pltpu.CompilerParams(
            dimension_semantics=("parallel",),
            vmem_limit_bytes=32 * 1024 * 1024,
        ),
        cost_estimate=pl.CostEstimate(
            flops=flops,
            transcendentals=Bp * (OUT_PADDED + 1),
            bytes_accessed=bytes_accessed,
        ),
    )(xb, w1b, b1.astype(jnp.float32), w2b, b2.astype(jnp.float32), w3p, b3p)

    return out[:B, :OUT_FEATURES]


def init_params(key):
    """Deterministic init matching nn.Linear shapes (stored as (in, out))."""
    k1, k2, k3, k4, k5, k6 = jax.random.split(key, 6)

    def uinit(k, shape, fan_in):
        bound = 1.0 / jnp.sqrt(fan_in)
        return jax.random.uniform(k, shape, jnp.float32, -bound, bound)

    w1 = uinit(k1, (IN_FEATURES, HIDDEN), 784.0)
    b1 = uinit(k2, (1, HIDDEN), 784.0)
    w2 = uinit(k3, (HIDDEN, HIDDEN), 512.0)
    b2 = uinit(k4, (1, HIDDEN), 512.0)
    w3 = uinit(k5, (HIDDEN, OUT_FEATURES), 512.0)
    b3 = uinit(k6, (1, OUT_FEATURES), 512.0)
    return (w1, b1, w2, b2, w3, b3)


def _reference(x, params):
    """Same math (bf16 matmul inputs, f32 accumulation) in plain JAX."""
    w1, b1, w2, b2, w3, b3 = params
    xb = x.reshape(-1, IN_FEATURES).astype(jnp.bfloat16)
    h1 = jnp.dot(xb, w1.astype(jnp.bfloat16), preferred_element_type=jnp.float32)
    h1 = jnp.maximum(h1 + b1, 0.0).astype(jnp.bfloat16)
    h2 = jnp.dot(h1, w2.astype(jnp.bfloat16), preferred_element_type=jnp.float32)
    h2 = jnp.maximum(h2 + b2, 0.0).astype(jnp.bfloat16)
    logits = jnp.dot(h2, w3.astype(jnp.bfloat16), preferred_element_type=jnp.float32)
    logits = logits + b3
    return jax.nn.log_softmax(logits, axis=1)


if __name__ == "__main__":
    key = jax.random.PRNGKey(0)
    kx, kp = jax.random.split(key)

    # Small NCHW batch matching MNIST conventions: (B=2, C=1, H=28, W=28).
    x = jax.random.normal(kx, (2, 1, 28, 28), jnp.float32)
    params = init_params(kp)

    out = net_forward(x, params)
    out = jax.block_until_ready(out)

    ref = _reference(x, params)
    assert out.shape == (2, 10)
    assert jnp.allclose(out, ref, atol=2e-3, rtol=2e-3)

    print("KERNEL_OK")
</pallas_src>

<mosaic_0001>
module attributes {stable_mosaic.version = 11 : i64} {
  func.func @_mlp_kernel(%arg0: i32, %arg1: memref<8x784xbf16, #tpu.memory_space<vmem>>, %arg2: memref<784x512xbf16, #tpu.memory_space<vmem>>, %arg3: memref<1x512xf32, #tpu.memory_space<vmem>>, %arg4: memref<512x512xbf16, #tpu.memory_space<vmem>>, %arg5: memref<1x512xf32, #tpu.memory_space<vmem>>, %arg6: memref<512x128xbf16, #tpu.memory_space<vmem>>, %arg7: memref<1x128xf32, #tpu.memory_space<vmem>>, %arg8: memref<8x128xf32, #tpu.memory_space<vmem>>) attributes {dimension_semantics = [#tpu.dimension_semantics<parallel>], iteration_bounds = array<i64: 1>, scalar_prefetch = 0 : i64, scratch_operands = 0 : i64, tpu.core_type = #tpu.core_type<tc>, window_params = [{transform_indices = @transform_0, window_bounds = array<i64: 8, 784>}, {pipeline_mode = #tpu.pipeline_mode<synchronous>, transform_indices = @transform_1, window_bounds = array<i64: 784, 512>}, {pipeline_mode = #tpu.pipeline_mode<synchronous>, transform_indices = @transform_2, window_bounds = array<i64: 1, 512>}, {pipeline_mode = #tpu.pipeline_mode<synchronous>, transform_indices = @transform_3, window_bounds = array<i64: 512, 512>}, {pipeline_mode = #tpu.pipeline_mode<synchronous>, transform_indices = @transform_4, window_bounds = array<i64: 1, 512>}, {pipeline_mode = #tpu.pipeline_mode<synchronous>, transform_indices = @transform_5, window_bounds = array<i64: 512, 128>}, {pipeline_mode = #tpu.pipeline_mode<synchronous>, transform_indices = @transform_6, window_bounds = array<i64: 1, 128>}, {transform_indices = @transform_7, window_bounds = array<i64: 8, 128>}]} {
    %c0 = arith.constant 0 : index
    %c0_0 = arith.constant 0 : index
    %0 = vector.load %arg1[%c0, %c0_0] : memref<8x784xbf16, #tpu.memory_space<vmem>>, vector<8x784xbf16>
    %c0_1 = arith.constant 0 : index
    %c0_2 = arith.constant 0 : index
    %1 = vector.load %arg2[%c0_1, %c0_2] : memref<784x512xbf16, #tpu.memory_space<vmem>>, vector<784x512xbf16>
    %cst = arith.constant dense<0.000000e+00> : vector<8x512xf32>
    %2 = tpu.matmul %0, %1, %cst {dimension_numbers = #tpu.dot_dimension_numbers<[1], [0], [0], [1], [0, 0, 1, 1], [], []>} : vector<8x784xbf16>, vector<784x512xbf16>, vector<8x512xf32> -> vector<8x512xf32>
    %c0_3 = arith.constant 0 : index
    %c0_4 = arith.constant 0 : index
    %3 = vector.load %arg3[%c0_3, %c0_4] : memref<1x512xf32, #tpu.memory_space<vmem>>, vector<1x512xf32>
    %4 = vector.broadcast %3 : vector<1x512xf32> to vector<8x512xf32>
    %5 = arith.addf %2, %4 : vector<8x512xf32>
    %cst_5 = arith.constant 0.000000e+00 : f32
    %6 = vector.broadcast %cst_5 : f32 to vector<8x512xf32>
    %7 = arith.maximumf %5, %6 : vector<8x512xf32>
    %8 = arith.truncf %7 : vector<8x512xf32> to vector<8x512xbf16>
    %c0_6 = arith.constant 0 : index
    %c0_7 = arith.constant 0 : index
    %9 = vector.load %arg4[%c0_6, %c0_7] : memref<512x512xbf16, #tpu.memory_space<vmem>>, vector<512x512xbf16>
    %cst_8 = arith.constant dense<0.000000e+00> : vector<8x512xf32>
    %10 = tpu.matmul %8, %9, %cst_8 {dimension_numbers = #tpu.dot_dimension_numbers<[1], [0], [0], [1], [0, 0, 1, 1], [], []>} : vector<8x512xbf16>, vector<512x512xbf16>, vector<8x512xf32> -> vector<8x512xf32>
    %c0_9 = arith.constant 0 : index
    %c0_10 = arith.constant 0 : index
    %11 = vector.load %arg5[%c0_9, %c0_10] : memref<1x512xf32, #tpu.memory_space<vmem>>, vector<1x512xf32>
    %12 = vector.broadcast %11 : vector<1x512xf32> to vector<8x512xf32>
    %13 = arith.addf %10, %12 : vector<8x512xf32>
    %cst_11 = arith.constant 0.000000e+00 : f32
    %14 = vector.broadcast %cst_11 : f32 to vector<8x512xf32>
    %15 = arith.maximumf %13, %14 : vector<8x512xf32>
    %16 = arith.truncf %15 : vector<8x512xf32> to vector<8x512xbf16>
    %c0_12 = arith.constant 0 : index
    %c0_13 = arith.constant 0 : index
    %17 = vector.load %arg6[%c0_12, %c0_13] : memref<512x128xbf16, #tpu.memory_space<vmem>>, vector<512x128xbf16>
    %cst_14 = arith.constant dense<0.000000e+00> : vector<8x128xf32>
    %18 = tpu.matmul %16, %17, %cst_14 {dimension_numbers = #tpu.dot_dimension_numbers<[1], [0], [0], [1], [0, 0, 1, 1], [], []>} : vector<8x512xbf16>, vector<512x128xbf16>, vector<8x128xf32> -> vector<8x128xf32>
    %c0_15 = arith.constant 0 : index
    %c0_16 = arith.constant 0 : index
    %19 = vector.load %arg7[%c0_15, %c0_16] : memref<1x128xf32, #tpu.memory_space<vmem>>, vector<1x128xf32>
    %20 = vector.broadcast %19 : vector<1x128xf32> to vector<8x128xf32>
    %21 = arith.addf %18, %20 : vector<8x128xf32>
    %cst_17 = arith.constant dense<0xFF800000> : vector<8xf32>
    %22 = vector.multi_reduction <maximumf>, %21, %cst_17 [1] : vector<8x128xf32> to vector<8xf32>
    %23 = vector.shape_cast %22 : vector<8xf32> to vector<8x1xf32>
    %24 = vector.broadcast %23 : vector<8x1xf32> to vector<8x128xf32>
    %25 = arith.subf %21, %24 : vector<8x128xf32>
    %26 = math.exp %25 : vector<8x128xf32>
    %cst_18 = arith.constant dense<0.000000e+00> : vector<8xf32>
    %27 = vector.multi_reduction <add>, %26, %cst_18 [1] : vector<8x128xf32> to vector<8xf32>
    %28 = vector.shape_cast %27 : vector<8xf32> to vector<8x1xf32>
    %29 = math.log %28 : vector<8x1xf32>
    %30 = vector.broadcast %29 : vector<8x1xf32> to vector<8x128xf32>
    %31 = arith.subf %25, %30 : vector<8x128xf32>
    %c0_19 = arith.constant 0 : index
    %c0_20 = arith.constant 0 : index
    %32 = vector.load %arg8[%c0_19, %c0_20] : memref<8x128xf32, #tpu.memory_space<vmem>>, vector<8x128xf32>
    tpu.vector_store %arg8[%c0_19, %c0_20], %31 {strides = array<i32>} : memref<8x128xf32, #tpu.memory_space<vmem>>, vector<8x128xf32>,
    return
  }
  func.func @transform_0(%arg0: i32) -> (i32, i32) {
    %c0_i32 = arith.constant 0 : i32
    %c0_i32_0 = arith.constant 0 : i32
    return %arg0, %c0_i32 : i32, i32
  }
  func.func @transform_1(%arg0: i32) -> (i32, i32) {
    %c0_i32 = arith.constant 0 : i32
    %c0_i32_0 = arith.constant 0 : i32
    %c0_i32_1 = arith.constant 0 : i32
    return %c0_i32, %c0_i32_0 : i32, i32
  }
  func.func @transform_2(%arg0: i32) -> (i32, i32) {
    %c0_i32 = arith.constant 0 : i32
    %c0_i32_0 = arith.constant 0 : i32
    %c0_i32_1 = arith.constant 0 : i32
    return %c0_i32, %c0_i32_0 : i32, i32
  }
  func.func @transform_3(%arg0: i32) -> (i32, i32) {
    %c0_i32 = arith.constant 0 : i32
    %c0_i32_0 = arith.constant 0 : i32
    %c0_i32_1 = arith.constant 0 : i32
    return %c0_i32, %c0_i32_0 : i32, i32
  }
  func.func @transform_4(%arg0: i32) -> (i32, i32) {
    %c0_i32 = arith.constant 0 : i32
    %c0_i32_0 = arith.constant 0 : i32
    %c0_i32_1 = arith.constant 0 : i32
    return %c0_i32, %c0_i32_0 : i32, i32
  }
  func.func @transform_5(%arg0: i32) -> (i32, i32) {
    %c0_i32 = arith.constant 0 : i32
    %c0_i32_0 = arith.constant 0 : i32
    %c0_i32_1 = arith.constant 0 : i32
    return %c0_i32, %c0_i32_0 : i32, i32
  }
  func.func @transform_6(%arg0: i32) -> (i32, i32) {
    %c0_i32 = arith.constant 0 : i32
    %c0_i32_0 = arith.constant 0 : i32
    %c0_i32_1 = arith.constant 0 : i32
    return %c0_i32, %c0_i32_0 : i32, i32
  }
  func.func @transform_7(%arg0: i32) -> (i32, i32) {
    %c0_i32 = arith.constant 0 : i32
    %c0_i32_0 = arith.constant 0 : i32
    return %arg0, %c0_i32 : i32, i32
  }
}

</mosaic_0001>

<llo_original>
// kernel: tpu_custom_call.1
$region0: #{tpu_custom_call.1}
  #allocation0 [shape = 'u32[]', space=smem, size = 0x4, offset = 0x4, fixed_abs, tag = 'smem constant byte address 0x4 - core index']
  #allocation1 [shape = 'u32[144,128]{1,0:T(1,128)}', space=vmem, size = 0x12000, scoped, tag = 'internal scratch']
  %s0 = inlined_call_operand.hbm [shape: bf16[8,784], index: 0, kind: input, shape index: {}]
  %s1 = inlined_call_operand.hbm [shape: bf16[784,512], index: 1, kind: input, shape index: {}]
  %s2 = inlined_call_operand.hbm [shape: f32[1,512], index: 2, kind: input, shape index: {}]
  %s3 = inlined_call_operand.hbm [shape: bf16[512,512], index: 3, kind: input, shape index: {}]
  %s4 = inlined_call_operand.vmem [shape: f32[1,512], index: 4, kind: input, shape index: {}]
  %s5 = inlined_call_operand.hbm [shape: bf16[512,128], index: 5, kind: input, shape index: {}]
  %s6 = inlined_call_operand.vmem [shape: f32[1,128], index: 6, kind: input, shape index: {}]
  %s7 = inlined_call_operand.hbm [shape: f32[8,128], index: 7, kind: output, shape index: {}]
  %s8 = sld [smem:[#allocation0]]
  $region58: #{tpu_custom_call.1} parent=0
    _
  %s10 = ssub.s32 1, %s8
  %s11 = scalar_select 0, %s10, %s8
  $region1: #{tpu_custom_call.1} parent=0
    #allocation2 [shape = 'u8[14336]{0}', space=vmem, size = 0x3800, scoped, tag = 'input window, operand 0, single buffered']
    #allocation3 [shape = 's32[1]{0}', space=sflag, size = 0x4, scoped, tag = 'scoped memory for tpu_custom_call.1']
    #allocation4 [shape = 's32[1]{0}', space=sflag, size = 0x4, scoped, tag = 'scoped memory for tpu_custom_call.1']
    #allocation5 [shape = 'u8[802816]{0}', space=vmem, size = 0xc4000, scoped, tag = 'input window, operand 1, single buffered']
    #allocation6 [shape = 's32[1]{0}', space=sflag, size = 0x4, scoped, tag = 'scoped memory for tpu_custom_call.1']
    #allocation7 [shape = 'u8[2048]{0}', space=vmem, size = 0x800, scoped, tag = 'input window, operand 2, single buffered']
    #allocation8 [shape = 'u8[524288]{0}', space=vmem, size = 0x80000, scoped, tag = 'input window, operand 3, single buffered']
    #allocation9 [shape = 's32[1]{0}', space=sflag, size = 0x4, scoped, tag = 'scoped memory for tpu_custom_call.1']
    #allocation10 [shape = 'u8[131072]{0}', space=vmem, size = 0x20000, scoped, tag = 'input window, operand 5, single buffered']
    #allocation11 [shape = 'u8[4096]{0}', space=vmem, size = 0x1000, scoped, tag = 'output window, operand 0, single buffered']
    %12 = vsyncpa [#allocation3], 0
    %13 = vsyncpa [#allocation6], 0
    %14 = vsyncpa [#allocation9], 0
    %15 = vsyncpa [#allocation4], 0
    // Predicated region
    $region2: #{tpu_custom_call.1} parent=1 // pred_check
      _
    $region3: #{tpu_custom_call.1} parent=1 // pred_check_branch
      %17 = sbr.rel (0) target = $region5
    $region4: #{tpu_custom_call.1} parent=1 // pred_region
      %s19 = ssub.s32 448, 448
      %20 = vsyncadd [#allocation3], %s19
      %s22 = sshll.u32 [#allocation2], 4
      %s23 = int_to_ptr.vmem [resolvable:$true] %s22
      %25 = dma.hbm_to_vmem [thread:$0]  %s0, 448, %s23, [#allocation3]
    $region5: #{tpu_custom_call.1} parent=1 // pred_fallthru
      _
    // Predicated region
    $region6: #{tpu_custom_call.1} parent=1 // pred_check
      _
    $region7: #{tpu_custom_call.1} parent=1 // pred_check_branch
      %27 = sbr.rel (0) target = $region9
    $region8: #{tpu_custom_call.1} parent=1 // pred_region
      %s29 = ssub.s32 25088, 25088
      %30 = vsyncadd [#allocation6], %s29
      %s31 = sshll.u32 [#allocation5], 4
      %s32 = int_to_ptr.vmem [resolvable:$true] %s31
      %37 = dma.hbm_to_vmem [thread:$0]  %s1, 25088, %s32, [#allocation6], 256, 256, 16
    $region9: #{tpu_custom_call.1} parent=1 // pred_fallthru
      _
    // Predicated region
    $region10: #{tpu_custom_call.1} parent=1 // pred_check
      _
    $region11: #{tpu_custom_call.1} parent=1 // pred_check_branch
      %39 = sbr.rel (0) target = $region13
    $region12: #{tpu_custom_call.1} parent=1 // pred_region
      %s41 = ssub.s32 64, 64
      %42 = vsyncadd [#allocation6], %s41
      %s44 = sshll.u32 [#allocation7], 4
      %s45 = int_to_ptr.vmem [resolvable:$true] %s44
      %47 = dma.hbm_to_vmem [thread:$0]  %s2, 64, %s45, [#allocation6]
    $region13: #{tpu_custom_call.1} parent=1 // pred_fallthru
      _
    // Predicated region
    $region14: #{tpu_custom_call.1} parent=1 // pred_check
      _
    $region15: #{tpu_custom_call.1} parent=1 // pred_check_branch
      %49 = sbr.rel (0) target = $region17
    $region16: #{tpu_custom_call.1} parent=1 // pred_region
      %s51 = ssub.s32 16384, 16384
      %52 = vsyncadd [#allocation9], %s51
      %s53 = sshll.u32 [#allocation8], 4
      %s54 = int_to_ptr.vmem [resolvable:$true] %s53
      %59 = dma.hbm_to_vmem [thread:$0]  %s3, 16384, %s54, [#allocation9], 256, 256, 16
    $region17: #{tpu_custom_call.1} parent=1 // pred_fallthru
      _
    // Predicated region
    $region18: #{tpu_custom_call.1} parent=1 // pred_check
      _
    $region19: #{tpu_custom_call.1} parent=1 // pred_check_branch
      %61 = sbr.rel (0) target = $region21
    $region20: #{tpu_custom_call.1} parent=1 // pred_region
      _
    $region21: #{tpu_custom_call.1} parent=1 // pred_fallthru
      _
    // Predicated region
    $region22: #{tpu_custom_call.1} parent=1 // pred_check
      _
    $region23: #{tpu_custom_call.1} parent=1 // pred_check_branch
      %63 = sbr.rel (0) target = $region25
    $region24: #{tpu_custom_call.1} parent=1 // pred_region
      %s65 = ssub.s32 4096, 4096
      %66 = vsyncadd [#allocation9], %s65
      %s67 = sshll.u32 [#allocation10], 4
      %s68 = int_to_ptr.vmem [resolvable:$true] %s67
      %73 = dma.hbm_to_vmem [thread:$0]  %s5, 4096, %s68, [#allocation9], 64, 64, 4
    $region25: #{tpu_custom_call.1} parent=1 // pred_fallthru
      _
    // Predicated region
    $region26: #{tpu_custom_call.1} parent=1 // pred_check
      _
    $region27: #{tpu_custom_call.1} parent=1 // pred_check_branch
      %75 = sbr.rel (0) target = $region29
    $region28: #{tpu_custom_call.1} parent=1 // pred_region
      _
    $region29: #{tpu_custom_call.1} parent=1 // pred_fallthru
      _
    // Predicated region
    $region30: #{tpu_custom_call.1} parent=1 // pred_check
      _
    $region31: #{tpu_custom_call.1} parent=1 // pred_check_branch
      %77 = sbr.rel (0) target = $region33
    $region32: #{tpu_custom_call.1} parent=1 // pred_region
      %78 = dma.done [#allocation3], 448
    $region33: #{tpu_custom_call.1} parent=1 // pred_fallthru
      _
    // Predicated region
    $region34: #{tpu_custom_call.1} parent=1 // pred_check
      _
    $region35: #{tpu_custom_call.1} parent=1 // pred_check_branch
      %80 = sbr.rel (0) target = $region37
    $region36: #{tpu_custom_call.1} parent=1 // pred_region
      %81 = dma.done [#allocation6], 25088
    $region37: #{tpu_custom_call.1} parent=1 // pred_fallthru
      _
    // Predicated region
    $region38: #{tpu_custom_call.1} parent=1 // pred_check
      _
    $region39: #{tpu_custom_call.1} parent=1 // pred_check_branch
      %83 = sbr.rel (0) target = $region41
    $region40: #{tpu_custom_call.1} parent=1 // pred_region
      %84 = dma.done [#allocation6], 64
    $region41: #{tpu_custom_call.1} parent=1 // pred_fallthru
      _
    // Predicated region
    $region42: #{tpu_custom_call.1} parent=1 // pred_check
      _
    $region43: #{tpu_custom_call.1} parent=1 // pred_check_branch
      %86 = sbr.rel (0) target = $region45
    $region44: #{tpu_custom_call.1} parent=1 // pred_region
      %87 = dma.done [#allocation9], 16384
    $region45: #{tpu_custom_call.1} parent=1 // pred_fallthru
      _
    // Predicated region
    $region46: #{tpu_custom_call.1} parent=1 // pred_check
      _
    $region47: #{tpu_custom_call.1} parent=1 // pred_check_branch
      %89 = sbr.rel (0) target = $region49
    $region48: #{tpu_custom_call.1} parent=1 // pred_region
      %90 = dma.done [#allocation9], 4096
    $region49: #{tpu_custom_call.1} parent=1 // pred_fallthru
      _
    %v92 = vld [vmem:[#allocation2] sm:$0xff]
    %v93 = vld [vmem:[#allocation2 + $0x8] sm:$0xff]
    %v94 = vld [vmem:[#allocation2 + $0x10] sm:$0xff]
    %v95 = vld [vmem:[#allocation2 + $0x18] sm:$0xf]
    %v96 = vld [vmem:[#allocation5] sm:$0xff]
    %v97 = vld [vmem:[#allocation5 + $0x8] sm:$0xff]
    %v98 = vld [vmem:[#allocation5 + $0x10] sm:$0xff]
    %v99 = vld [vmem:[#allocation5 + $0x18] sm:$0xff]
    %v100 = vld [vmem:[#allocation5 + $0x20] sm:$0xff]
    %v101 = vld [vmem:[#allocation5 + $0x28] sm:$0xff]
    %v102 = vld [vmem:[#allocation5 + $0x30] sm:$0xff]
    %v103 = vld [vmem:[#allocation5 + $0x38] sm:$0xff]
    %v104 = vld [vmem:[#allocation5 + $0x40] sm:$0xff]
    %v105 = vld [vmem:[#allocation5 + $0x48] sm:$0xff]
    %v106 = vld [vmem:[#allocation5 + $0x50] sm:$0xff]
    %v107 = vld [vmem:[#allocation5 + $0x58] sm:$0xff]
    %v108 = vld [vmem:[#allocation5 + $0x60] sm:$0xff]
    %v109 = vld [vmem:[#allocation5 + $0x68] sm:$0xff]
    %v110 = vld [vmem:[#allocation5 + $0x70] sm:$0xff]
    %v111 = vld [vmem:[#allocation5 + $0x78] sm:$0xff]
    %v112 = vld [vmem:[#allocation5 + $0x80] sm:$0xff]
    %v113 = vld [vmem:[#allocation5 + $0x88] sm:$0xff]
    %v114 = vld [vmem:[#allocation5 + $0x90] sm:$0xff]
    %v115 = vld [vmem:[#allocation5 + $0x98] sm:$0xff]
    %v116 = vld [vmem:[#allocation5 + $0xa0] sm:$0xff]
    %v117 = vld [vmem:[#allocation5 + $0xa8] sm:$0xff]
    %v118 = vld [vmem:[#allocation5 + $0xb0] sm:$0xff]
    %v119 = vld [vmem:[#allocation5 + $0xb8] sm:$0xff]
    %v120 = vld [vmem:[#allocation5 + $0xc0] sm:$0xff]
    %v121 = vld [vmem:[#allocation5 + $0xc8] sm:$0xff]
    %v122 = vld [vmem:[#allocation5 + $0xd0] sm:$0xff]
    %v123 = vld [vmem:[#allocation5 + $0xd8] sm:$0xff]
    %v124 = vld [vmem:[#allocation5 + $0xe0] sm:$0xff]
    %v125 = vld [vmem:[#allocation5 + $0xe8] sm:$0xff]
    %v126 = vld [vmem:[#allocation5 + $0xf0] sm:$0xff]
    %v127 = vld [vmem:[#allocation5 + $0xf8] sm:$0xff]
    %v128 = vld [vmem:[#allocation5 + $0x100] sm:$0xff]
    %v129 = vld [vmem:[#allocation5 + $0x108] sm:$0xff]
    %v130 = vld [vmem:[#allocation5 + $0x110] sm:$0xff]
    %v131 = vld [vmem:[#allocation5 + $0x118] sm:$0xff]
    %v132 = vld [vmem:[#allocation5 + $0x120] sm:$0xff]
    %v133 = vld [vmem:[#allocation5 + $0x128] sm:$0xff]
    %v134 = vld [vmem:[#allocation5 + $0x130] sm:$0xff]
    %v135 = vld [vmem:[#allocation5 + $0x138] sm:$0xff]
    %v136 = vld [vmem:[#allocation5 + $0x140] sm:$0xff]
    %v137 = vld [vmem:[#allocation5 + $0x148] sm:$0xff]
    %v138 = vld [vmem:[#allocation5 + $0x150] sm:$0xff]
    %v139 = vld [vmem:[#allocation5 + $0x158] sm:$0xff]
    %v140 = vld [vmem:[#allocation5 + $0x160] sm:$0xff]
    %v141 = vld [vmem:[#allocation5 + $0x168] sm:$0xff]
    %v142 = vld [vmem:[#allocation5 + $0x170] sm:$0xff]
    %v143 = vld [vmem:[#allocation5 + $0x178] sm:$0xff]
    %v144 = vld [vmem:[#allocation5 + $0x180] sm:$0xff]
    %v145 = vld [vmem:[#allocation5 + $0x188] sm:$0xff]
    %v146 = vld [vmem:[#allocation5 + $0x190] sm:$0xff]
    %v147 = vld [vmem:[#allocation5 + $0x198] sm:$0xff]
    %v148 = vld [vmem:[#allocation5 + $0x1a0] sm:$0xff]
    %v149 = vld [vmem:[#allocation5 + $0x1a8] sm:$0xff]
    %v150 = vld [vmem:[#allocation5 + $0x1b0] sm:$0xff]
    %v151 = vld [vmem:[#allocation5 + $0x1b8] sm:$0xff]
    %v152 = vld [vmem:[#allocation5 + $0x1c0] sm:$0xff]
    %v153 = vld [vmem:[#allocation5 + $0x1c8] sm:$0xff]
    %v154 = vld [vmem:[#allocation5 + $0x1d0] sm:$0xff]
    %v155 = vld [vmem:[#allocation5 + $0x1d8] sm:$0xff]
    %v156 = vld [vmem:[#allocation5 + $0x1e0] sm:$0xff]
    %v157 = vld [vmem:[#allocation5 + $0x1e8] sm:$0xff]
    %v158 = vld [vmem:[#allocation5 + $0x1f0] sm:$0xff]
    %v159 = vld [vmem:[#allocation5 + $0x1f8] sm:$0xff]
    %v160 = vld [vmem:[#allocation5 + $0x200] sm:$0xff]
    %v161 = vld [vmem:[#allocation5 + $0x208] sm:$0xff]
    %v162 = vld [vmem:[#allocation5 + $0x210] sm:$0xff]
    %v163 = vld [vmem:[#allocation5 + $0x218] sm:$0xff]
    %v164 = vld [vmem:[#allocation5 + $0x220] sm:$0xff]
    %v165 = vld [vmem:[#allocation5 + $0x228] sm:$0xff]
    %v166 = vld [vmem:[#allocation5 + $0x230] sm:$0xff]
    %v167 = vld [vmem:[#allocation5 + $0x238] sm:$0xff]
    %v168 = vld [vmem:[#allocation5 + $0x240] sm:$0xff]
    %v169 = vld [vmem:[#allocation5 + $0x248] sm:$0xff]
    %v170 = vld [vmem:[#allocation5 + $0x250] sm:$0xff]
    %v171 = vld [vmem:[#allocation5 + $0x258] sm:$0xff]
    %v172 = vld [vmem:[#allocation5 + $0x260] sm:$0xff]
    %v173 = vld [vmem:[#allocation5 + $0x268] sm:$0xff]
    %v174 = vld [vmem:[#allocation5 + $0x270] sm:$0xff]
    %v175 = vld [vmem:[#allocation5 + $0x278] sm:$0xff]
    %v176 = vld [vmem:[#allocation5 + $0x280] sm:$0xff]
    %v177 = vld [vmem:[#allocation5 + $0x288] sm:$0xff]
    %v178 = vld [vmem:[#allocation5 + $0x290] sm:$0xff]
    %v179 = vld [vmem:[#allocation5 + $0x298] sm:$0xff]
    %v180 = vld [vmem:[#allocation5 + $0x2a0] sm:$0xff]
    %v181 = vld [vmem:[#allocation5 + $0x2a8] sm:$0xff]
    %v182 = vld [vmem:[#allocation5 + $0x2b0] sm:$0xff]
    %v183 = vld [vmem:[#allocation5 + $0x2b8] sm:$0xff]
    %v184 = vld [vmem:[#allocation5 + $0x2c0] sm:$0xff]
    %v185 = vld [vmem:[#allocation5 + $0x2c8] sm:$0xff]
    %v186 = vld [vmem:[#allocation5 + $0x2d0] sm:$0xff]
    %v187 = vld [vmem:[#allocation5 + $0x2d8] sm:$0xff]
    %v188 = vld [vmem:[#allocation5 + $0x2e0] sm:$0xff]
    %v189 = vld [vmem:[#allocation5 + $0x2e8] sm:$0xff]
    %v190 = vld [vmem:[#allocation5 + $0x2f0] sm:$0xff]
    %v191 = vld [vmem:[#allocation5 + $0x2f8] sm:$0xff]
    %v192 = vld [vmem:[#allocation5 + $0x300] sm:$0xff]
    %v193 = vld [vmem:[#allocation5 + $0x308] sm:$0xff]
    %v194 = vld [vmem:[#allocation5 + $0x310] sm:$0xff]
    %v195 = vld [vmem:[#allocation5 + $0x318] sm:$0xff]
    %v196 = vld [vmem:[#allocation5 + $0x320] sm:$0xff]
    %v197 = vld [vmem:[#allocation5 + $0x328] sm:$0xff]
    %v198 = vld [vmem:[#allocation5 + $0x330] sm:$0xff]
    %v199 = vld [vmem:[#allocation5 + $0x338] sm:$0xff]
    %v200 = vld [vmem:[#allocation5 + $0x340] sm:$0xff]
    %v201 = vld [vmem:[#allocation5 + $0x348] sm:$0xff]
    %v202 = vld [vmem:[#allocation5 + $0x350] sm:$0xff]
    %v203 = vld [vmem:[#allocation5 + $0x358] sm:$0xff]
    %v204 = vld [vmem:[#allocation5 + $0x360] sm:$0xff]
    %v205 = vld [vmem:[#allocation5 + $0x368] sm:$0xff]
    %v206 = vld [vmem:[#allocation5 + $0x370] sm:$0xff]
    %v207 = vld [vmem:[#allocation5 + $0x378] sm:$0xff]
    %v208 = vld [vmem:[#allocation5 + $0x380] sm:$0xff]
    %v209 = vld [vmem:[#allocation5 + $0x388] sm:$0xff]
    %v210 = vld [vmem:[#allocation5 + $0x390] sm:$0xff]
    %v211 = vld [vmem:[#allocation5 + $0x398] sm:$0xff]
    %v212 = vld [vmem:[#allocation5 + $0x3a0] sm:$0xff]
    %v213 = vld [vmem:[#allocation5 + $0x3a8] sm:$0xff]
    %v214 = vld [vmem:[#allocation5 + $0x3b0] sm:$0xff]
    %v215 = vld [vmem:[#allocation5 + $0x3b8] sm:$0xff]
    %v216 = vld [vmem:[#allocation5 + $0x3c0] sm:$0xff]
    %v217 = vld [vmem:[#allocation5 + $0x3c8] sm:$0xff]
    %v218 = vld [vmem:[#allocation5 + $0x3d0] sm:$0xff]
    %v219 = vld [vmem:[#allocation5 + $0x3d8] sm:$0xff]
    %v220 = vld [vmem:[#allocation5 + $0x3e0] sm:$0xff]
    %v221 = vld [vmem:[#allocation5 + $0x3e8] sm:$0xff]
    %v222 = vld [vmem:[#allocation5 + $0x3f0] sm:$0xff]
    %v223 = vld [vmem:[#allocation5 + $0x3f8] sm:$0xff]
    %v224 = vld [vmem:[#allocation5 + $0x400] sm:$0xff]
    %v225 = vld [vmem:[#allocation5 + $0x408] sm:$0xff]
    %v226 = vld [vmem:[#allocation5 + $0x410] sm:$0xff]
    %v227 = vld [vmem:[#allocation5 + $0x418] sm:$0xff]
    %v228 = vld [vmem:[#allocation5 + $0x420] sm:$0xff]
    %v229 = vld [vmem:[#allocation5 + $0x428] sm:$0xff]
    %v230 = vld [vmem:[#allocation5 + $0x430] sm:$0xff]
    %v231 = vld [vmem:[#allocation5 + $0x438] sm:$0xff]
    %v232 = vld [vmem:[#allocation5 + $0x440] sm:$0xff]
    %v233 = vld [vmem:[#allocation5 + $0x448] sm:$0xff]
    %v234 = vld [vmem:[#allocation5 + $0x450] sm:$0xff]
    %v235 = vld [vmem:[#allocation5 + $0x458] sm:$0xff]
    %v236 = vld [vmem:[#allocation5 + $0x460] sm:$0xff]
    %v237 = vld [vmem:[#allocation5 + $0x468] sm:$0xff]
    %v238 = vld [vmem:[#allocation5 + $0x470] sm:$0xff]
    %v239 = vld [vmem:[#allocation5 + $0x478] sm:$0xff]
    %v240 = vld [vmem:[#allocation5 + $0x480] sm:$0xff]
    %v241 = vld [vmem:[#allocation5 + $0x488] sm:$0xff]
    %v242 = vld [vmem:[#allocation5 + $0x490] sm:$0xff]
    %v243 = vld [vmem:[#allocation5 + $0x498] sm:$0xff]
    %v244 = vld [vmem:[#allocation5 + $0x4a0] sm:$0xff]
    %v245 = vld [vmem:[#allocation5 + $0x4a8] sm:$0xff]
    %v246 = vld [vmem:[#allocation5 + $0x4b0] sm:$0xff]
    %v247 = vld [vmem:[#allocation5 + $0x4b8] sm:$0xff]
    %v248 = vld [vmem:[#allocation5 + $0x4c0] sm:$0xff]
    %v249 = vld [vmem:[#allocation5 + $0x4c8] sm:$0xff]
    %v250 = vld [vmem:[#allocation5 + $0x4d0] sm:$0xff]
    %v251 = vld [vmem:[#allocation5 + $0x4d8] sm:$0xff]
    %v252 = vld [vmem:[#allocation5 + $0x4e0] sm:$0xff]
    %v253 = vld [vmem:[#allocation5 + $0x4e8] sm:$0xff]
    %v254 = vld [vmem:[#allocation5 + $0x4f0] sm:$0xff]
    %v255 = vld [vmem:[#allocation5 + $0x4f8] sm:$0xff]
    %v256 = vld [vmem:[#allocation5 + $0x500] sm:$0xff]
    %v257 = vld [vmem:[#allocation5 + $0x508] sm:$0xff]
    %v258 = vld [vmem:[#allocation5 + $0x510] sm:$0xff]
    %v259 = vld [vmem:[#allocation5 + $0x518] sm:$0xff]
    %v260 = vld [vmem:[#allocation5 + $0x520] sm:$0xff]
    %v261 = vld [vmem:[#allocation5 + $0x528] sm:$0xff]
    %v262 = vld [vmem:[#allocation5 + $0x530] sm:$0xff]
    %v263 = vld [vmem:[#allocation5 + $0x538] sm:$0xff]
    %v264 = vld [vmem:[#allocation5 + $0x540] sm:$0xff]
    %v265 = vld [vmem:[#allocation5 + $0x548] sm:$0xff]
    %v266 = vld [vmem:[#allocation5 + $0x550] sm:$0xff]
    %v267 = vld [vmem:[#allocation5 + $0x558] sm:$0xff]
    %v268 = vld [vmem:[#allocation5 + $0x560] sm:$0xff]
    %v269 = vld [vmem:[#allocation5 + $0x568] sm:$0xff]
    %v270 = vld [vmem:[#allocation5 + $0x570] sm:$0xff]
    %v271 = vld [vmem:[#allocation5 + $0x578] sm:$0xff]
    %v272 = vld [vmem:[#allocation5 + $0x580] sm:$0xff]
    %v273 = vld [vmem:[#allocation5 + $0x588] sm:$0xff]
    %v274 = vld [vmem:[#allocation5 + $0x590] sm:$0xff]
    %v275 = vld [vmem:[#allocation5 + $0x598] sm:$0xff]
    %v276 = vld [vmem:[#allocation5 + $0x5a0] sm:$0xff]
    %v277 = vld [vmem:[#allocation5 + $0x5a8] sm:$0xff]
    %v278 = vld [vmem:[#allocation5 + $0x5b0] sm:$0xff]
    %v279 = vld [vmem:[#allocation5 + $0x5b8] sm:$0xff]
    %v280 = vld [vmem:[#allocation5 + $0x5c0] sm:$0xff]
    %v281 = vld [vmem:[#allocation5 + $0x5c8] sm:$0xff]
    %v282 = vld [vmem:[#allocation5 + $0x5d0] sm:$0xff]
    %v283 = vld [vmem:[#allocation5 + $0x5d8] sm:$0xff]
    %v284 = vld [vmem:[#allocation5 + $0x5e0] sm:$0xff]
    %v285 = vld [vmem:[#allocation5 + $0x5e8] sm:$0xff]
    %v286 = vld [vmem:[#allocation5 + $0x5f0] sm:$0xff]
    %v287 = vld [vmem:[#allocation5 + $0x5f8] sm:$0xff]
    %v288 = vld [vmem:[#allocation5 + $0x600] sm:$0xff]
    %v289 = vld [vmem:[#allocation5 + $0x608] sm:$0xff]
    %v290 = vld [vmem:[#allocation5 + $0x610] sm:$0xff]
    %v291 = vld [vmem:[#allocation5 + $0x618] sm:$0xff]
    %v292 = vld [vmem:[#allocation7] sm:$0xf]
    %v294 = vlaneseq
    %v295 = vshrl.u32 %v294, 7
    %v296 = vsub.s32 0, %v295
    %v297 = vrot.slane %v292, %v296
    %v298 = vlaneseq
    %v299 = vshrl.u32 %v298, 7
    %v300 = vsub.s32 1, %v299
    %v301 = vrot.slane %v292, %v300
    %v302 = vlaneseq
    %v303 = vshrl.u32 %v302, 7
    %v304 = vsub.s32 2, %v303
    %v305 = vrot.slane %v292, %v304
    %v306 = vlaneseq
    %v307 = vshrl.u32 %v306, 7
    %v308 = vsub.s32 3, %v307
    %v309 = vrot.slane %v292, %v308
    %v318 = vunpack.c.l.b16 %v92
    %v319 = vunpack.c.h.b16 %v92
    %v320 = vunpack.c.l.b16 %v93
    %v321 = vunpack.c.h.b16 %v93
    %v322 = vunpack.c.l.b16 %v94
    %v323 = vunpack.c.h.b16 %v94
    %v324 = vunpack.c.l.b16 %v95
    %v325 = vpack.c.b16 %v318, %v318
    %v326 = vpack.c.b16 %v319, %v319
    %v327 = vpack.c.b16 %v320, %v320
    %v328 = vpack.c.b16 %v321, %v321
    %v329 = vpack.c.b16 %v322, %v322
    %v330 = vpack.c.b16 %v323, %v323
    %v331 = vpack.c.b16 %v324, %v324
    %v534 = vunpack.c.l.b16 %v96
    %v535 = vunpack.c.h.b16 %v96
    %v536 = vunpack.c.l.b16 %v97
    %v537 = vunpack.c.h.b16 %v97
    %v538 = vunpack.c.l.b16 %v98
    %v539 = vunpack.c.h.b16 %v98
    %v540 = vunpack.c.l.b16 %v99
    %v541 = vunpack.c.h.b16 %v99
    %v542 = vunpack.c.l.b16 %v100
    %v543 = vunpack.c.h.b16 %v100
    %v544 = vunpack.c.l.b16 %v101
    %v545 = vunpack.c.h.b16 %v101
    %v546 = vunpack.c.l.b16 %v102
    %v547 = vunpack.c.h.b16 %v102
    %v548 = vunpack.c.l.b16 %v103
    %v549 = vunpack.c.h.b16 %v103
    %v550 = vunpack.c.l.b16 %v104
    %v551 = vunpack.c.h.b16 %v104
    %v552 = vunpack.c.l.b16 %v105
    %v553 = vunpack.c.h.b16 %v105
    %v554 = vunpack.c.l.b16 %v106
    %v555 = vunpack.c.h.b16 %v106
    %v556 = vunpack.c.l.b16 %v107
    %v557 = vunpack.c.h.b16 %v107
    %v558 = vunpack.c.l.b16 %v108
    %v559 = vunpack.c.h.b16 %v108
    %v560 = vunpack.c.l.b16 %v109
    %v561 = vunpack.c.h.b16 %v109
    %v562 = vunpack.c.l.b16 %v110
    %v563 = vunpack.c.h.b16 %v110
    %v564 = vunpack.c.l.b16 %v111
    %v565 = vunpack.c.h.b16 %v111
    %v566 = vunpack.c.l.b16 %v112
    %v567 = vunpack.c.h.b16 %v112
    %v568 = vunpack.c.l.b16 %v113
    %v569 = vunpack.c.h.b16 %v113
    %v570 = vunpack.c.l.b16 %v114
    %v571 = vunpack.c.h.b16 %v114
    %v572 = vunpack.c.l.b16 %v115
    %v573 = vunpack.c.h.b16 %v115
    %v574 = vunpack.c.l.b16 %v116
    %v575 = vunpack.c.h.b16 %v116
    %v576 = vunpack.c.l.b16 %v117
    %v577 = vunpack.c.h.b16 %v117
    %v578 = vunpack.c.l.b16 %v118
    %v579 = vunpack.c.h.b16 %v118
    %v580 = vunpack.c.l.b16 %v119
    %v581 = vunpack.c.h.b16 %v119
    %v582 = vunpack.c.l.b16 %v120
    %v583 = vunpack.c.h.b16 %v120
    %v584 = vunpack.c.l.b16 %v121
    %v585 = vunpack.c.h.b16 %v121
    %v586 = vunpack.c.l.b16 %v122
    %v587 = vunpack.c.h.b16 %v122
    %v588 = vunpack.c.l.b16 %v123
    %v589 = vunpack.c.h.b16 %v123
    %v590 = vunpack.c.l.b16 %v124
    %v591 = vunpack.c.h.b16 %v124
    %v592 = vunpack.c.l.b16 %v125
    %v593 = vunpack.c.h.b16 %v125
    %v594 = vunpack.c.l.b16 %v126
    %v595 = vunpack.c.h.b16 %v126
    %v596 = vunpack.c.l.b16 %v127
    %v597 = vunpack.c.h.b16 %v127
    %v598 = vunpack.c.l.b16 %v128
    %v599 = vunpack.c.h.b16 %v128
    %v600 = vunpack.c.l.b16 %v129
    %v601 = vunpack.c.h.b16 %v129
    %v602 = vunpack.c.l.b16 %v130
    %v603 = vunpack.c.h.b16 %v130
    %v604 = vunpack.c.l.b16 %v131
    %v605 = vunpack.c.h.b16 %v131
    %v606 = vunpack.c.l.b16 %v132
    %v607 = vunpack.c.h.b16 %v132
    %v608 = vunpack.c.l.b16 %v133
    %v609 = vunpack.c.h.b16 %v133
    %v610 = vunpack.c.l.b16 %v134
    %v611 = vunpack.c.h.b16 %v134
    %v612 = vunpack.c.l.b16 %v135
    %v613 = vunpack.c.h.b16 %v135
    %v614 = vunpack.c.l.b16 %v136
    %v615 = vunpack.c.h.b16 %v136
    %v616 = vunpack.c.l.b16 %v137
    %v617 = vunpack.c.h.b16 %v137
    %v618 = vunpack.c.l.b16 %v138
    %v619 = vunpack.c.h.b16 %v138
    %v620 = vunpack.c.l.b16 %v139
    %v621 = vunpack.c.h.b16 %v139
    %v622 = vunpack.c.l.b16 %v140
    %v623 = vunpack.c.h.b16 %v140
    %v624 = vunpack.c.l.b16 %v141
    %v625 = vunpack.c.h.b16 %v141
    %v626 = vunpack.c.l.b16 %v142
    %v627 = vunpack.c.h.b16 %v142
    %v628 = vunpack.c.l.b16 %v143
    %v629 = vunpack.c.h.b16 %v143
    %v630 = vunpack.c.l.b16 %v144
    %v631 = vunpack.c.h.b16 %v144
    %v632 = vunpack.c.l.b16 %v145
    %v633 = vunpack.c.h.b16 %v145
    %v634 = vunpack.c.l.b16 %v146
    %v635 = vunpack.c.h.b16 %v146
    %v636 = vunpack.c.l.b16 %v147
    %v637 = vunpack.c.h.b16 %v147
    %v638 = vunpack.c.l.b16 %v148
    %v639 = vunpack.c.h.b16 %v148
    %v640 = vunpack.c.l.b16 %v149
    %v641 = vunpack.c.h.b16 %v149
    %v642 = vunpack.c.l.b16 %v150
    %v643 = vunpack.c.h.b16 %v150
    %v644 = vunpack.c.l.b16 %v151
    %v645 = vunpack.c.h.b16 %v151
    %v646 = vunpack.c.l.b16 %v152
    %v647 = vunpack.c.h.b16 %v152
    %v648 = vunpack.c.l.b16 %v153
    %v649 = vunpack.c.h.b16 %v153
    %v650 = vunpack.c.l.b16 %v154
    %v651 = vunpack.c.h.b16 %v154
    %v652 = vunpack.c.l.b16 %v155
    %v653 = vunpack.c.h.b16 %v155
    %v654 = vunpack.c.l.b16 %v156
    %v655 = vunpack.c.h.b16 %v156
    %v656 = vunpack.c.l.b16 %v157
    %v657 = vunpack.c.h.b16 %v157
    %v658 = vunpack.c.l.b16 %v158
    %v659 = vunpack.c.h.b16 %v158
    %v660 = vunpack.c.l.b16 %v159
    %v661 = vunpack.c.h.b16 %v159
    %v662 = vunpack.c.l.b16 %v160
    %v663 = vunpack.c.h.b16 %v160
    %v664 = vunpack.c.l.b16 %v161
    %v665 = vunpack.c.h.b16 %v161
    %v666 = vunpack.c.l.b16 %v162
    %v667 = vunpack.c.h.b16 %v162
    %v668 = vunpack.c.l.b16 %v163
    %v669 = vunpack.c.h.b16 %v163
    %v670 = vunpack.c.l.b16 %v164
    %v671 = vunpack.c.h.b16 %v164
    %v672 = vunpack.c.l.b16 %v165
    %v673 = vunpack.c.h.b16 %v165
    %v674 = vunpack.c.l.b16 %v166
    %v675 = vunpack.c.h.b16 %v166
    %v676 = vunpack.c.l.b16 %v167
    %v677 = vunpack.c.h.b16 %v167
    %v678 = vunpack.c.l.b16 %v168
    %v679 = vunpack.c.h.b16 %v168
    %v680 = vunpack.c.l.b16 %v169
    %v681 = vunpack.c.h.b16 %v169
    %v682 = vunpack.c.l.b16 %v170
    %v683 = vunpack.c.h.b16 %v170
    %v684 = vunpack.c.l.b16 %v171
    %v685 = vunpack.c.h.b16 %v171
    %v686 = vunpack.c.l.b16 %v172
    %v687 = vunpack.c.h.b16 %v172
    %v688 = vunpack.c.l.b16 %v173
    %v689 = vunpack.c.h.b16 %v173
    %v690 = vunpack.c.l.b16 %v174
    %v691 = vunpack.c.h.b16 %v174
    %v692 = vunpack.c.l.b16 %v175
    %v693 = vunpack.c.h.b16 %v175
    %v694 = vunpack.c.l.b16 %v176
    %v695 = vunpack.c.h.b16 %v176
    %v696 = vunpack.c.l.b16 %v177
    %v697 = vunpack.c.h.b16 %v177
    %v698 = vunpack.c.l.b16 %v178
    %v699 = vunpack.c.h.b16 %v178
    %v700 = vunpack.c.l.b16 %v179
    %v701 = vunpack.c.h.b16 %v179
    %v702 = vunpack.c.l.b16 %v180
    %v703 = vunpack.c.h.b16 %v180
    %v704 = vunpack.c.l.b16 %v181
    %v705 = vunpack.c.h.b16 %v181
    %v706 = vunpack.c.l.b16 %v182
    %v707 = vunpack.c.h.b16 %v182
    %v708 = vunpack.c.l.b16 %v183
    %v709 = vunpack.c.h.b16 %v183
    %v710 = vunpack.c.l.b16 %v184
    %v711 = vunpack.c.h.b16 %v184
    %v712 = vunpack.c.l.b16 %v185
    %v713 = vunpack.c.h.b16 %v185
    %v714 = vunpack.c.l.b16 %v186
    %v715 = vunpack.c.h.b16 %v186
    %v716 = vunpack.c.l.b16 %v187
    %v717 = vunpack.c.h.b16 %v187
    %v718 = vunpack.c.l.b16 %v188
    %v719 = vunpack.c.h.b16 %v188
    %v720 = vunpack.c.l.b16 %v189
    %v721 = vunpack.c.h.b16 %v189
    %v722 = vunpack.c.l.b16 %v190
    %v723 = vunpack.c.h.b16 %v190
    %v724 = vunpack.c.l.b16 %v191
    %v725 = vunpack.c.h.b16 %v191
    %v726 = vunpack.c.l.b16 %v192
    %v727 = vunpack.c.h.b16 %v192
    %v728 = vunpack.c.l.b16 %v193
    %v729 = vunpack.c.h.b16 %v193
    %v730 = vunpack.c.l.b16 %v194
    %v731 = vunpack.c.h.b16 %v194
    %v732 = vunpack.c.l.b16 %v195
    %v733 = vunpack.c.h.b16 %v195
    %v734 = vunpack.c.l.b16 %v196
    %v735 = vunpack.c.h.b16 %v196
    %v736 = vunpack.c.l.b16 %v197
    %v737 = vunpack.c.h.b16 %v197
    %v738 = vunpack.c.l.b16 %v198
    %v739 = vunpack.c.h.b16 %v198
    %v740 = vunpack.c.l.b16 %v199
    %v741 = vunpack.c.h.b16 %v199
    %v742 = vunpack.c.l.b16 %v200
    %v743 = vunpack.c.h.b16 %v200
    %v744 = vunpack.c.l.b16 %v201
    %v745 = vunpack.c.h.b16 %v201
    %v746 = vunpack.c.l.b16 %v202
    %v747 = vunpack.c.h.b16 %v202
    %v748 = vunpack.c.l.b16 %v203
    %v749 = vunpack.c.h.b16 %v203
    %v750 = vunpack.c.l.b16 %v204
    %v751 = vunpack.c.h.b16 %v204
    %v752 = vunpack.c.l.b16 %v205
    %v753 = vunpack.c.h.b16 %v205
    %v754 = vunpack.c.l.b16 %v206
    %v755 = vunpack.c.h.b16 %v206
    %v756 = vunpack.c.l.b16 %v207
    %v757 = vunpack.c.h.b16 %v207
    %v758 = vunpack.c.l.b16 %v208
    %v759 = vunpack.c.h.b16 %v208
    %v760 = vunpack.c.l.b16 %v209
    %v761 = vunpack.c.h.b16 %v209
    %v762 = vunpack.c.l.b16 %v210
    %v763 = vunpack.c.h.b16 %v210
    %v764 = vunpack.c.l.b16 %v211
    %v765 = vunpack.c.h.b16 %v211
    %v766 = vunpack.c.l.b16 %v212
    %v767 = vunpack.c.h.b16 %v212
    %v768 = vunpack.c.l.b16 %v213
    %v769 = vunpack.c.h.b16 %v213
    %v770 = vunpack.c.l.b16 %v214
    %v771 = vunpack.c.h.b16 %v214
    %v772 = vunpack.c.l.b16 %v215
    %v773 = vunpack.c.h.b16 %v215
    %v774 = vunpack.c.l.b16 %v216
    %v775 = vunpack.c.h.b16 %v216
    %v776 = vunpack.c.l.b16 %v217
    %v777 = vunpack.c.h.b16 %v217
    %v778 = vunpack.c.l.b16 %v218
    %v779 = vunpack.c.h.b16 %v218
    %v780 = vunpack.c.l.b16 %v219
    %v781 = vunpack.c.h.b16 %v219
    %v782 = vunpack.c.l.b16 %v220
    %v783 = vunpack.c.h.b16 %v220
    %v784 = vunpack.c.l.b16 %v221
    %v785 = vunpack.c.h.b16 %v221
    %v786 = vunpack.c.l.b16 %v222
    %v787 = vunpack.c.h.b16 %v222
    %v788 = vunpack.c.l.b16 %v223
    %v789 = vunpack.c.h.b16 %v223
    %v790 = vunpack.c.l.b16 %v224
    %v791 = vunpack.c.h.b16 %v224
    %v792 = vunpack.c.l.b16 %v225
    %v793 = vunpack.c.h.b16 %v225
    %v794 = vunpack.c.l.b16 %v226
    %v795 = vunpack.c.h.b16 %v226
    %v796 = vunpack.c.l.b16 %v227
    %v797 = vunpack.c.h.b16 %v227
    %v798 = vunpack.c.l.b16 %v228
    %v799 = vunpack.c.h.b16 %v228
    %v800 = vunpack.c.l.b16 %v229
    %v801 = vunpack.c.h.b16 %v229
    %v802 = vunpack.c.l.b16 %v230
    %v803 = vunpack.c.h.b16 %v230
    %v804 = vunpack.c.l.b16 %v231
    %v805 = vunpack.c.h.b16 %v231
    %v806 = vunpack.c.l.b16 %v232
    %v807 = vunpack.c.h.b16 %v232
    %v808 = vunpack.c.l.b16 %v233
    %v809 = vunpack.c.h.b16 %v233
    %v810 = vunpack.c.l.b16 %v234
    %v811 = vunpack.c.h.b16 %v234
    %v812 = vunpack.c.l.b16 %v235
    %v813 = vunpack.c.h.b16 %v235
    %v814 = vunpack.c.l.b16 %v236
    %v815 = vunpack.c.h.b16 %v236
    %v816 = vunpack.c.l.b16 %v237
    %v817 = vunpack.c.h.b16 %v237
    %v818 = vunpack.c.l.b16 %v238
    %v819 = vunpack.c.h.b16 %v238
    %v820 = vunpack.c.l.b16 %v239
    %v821 = vunpack.c.h.b16 %v239
    %v822 = vunpack.c.l.b16 %v240
    %v823 = vunpack.c.h.b16 %v240
    %v824 = vunpack.c.l.b16 %v241
    %v825 = vunpack.c.h.b16 %v241
    %v826 = vunpack.c.l.b16 %v242
    %v827 = vunpack.c.h.b16 %v242
    %v828 = vunpack.c.l.b16 %v243
    %v829 = vunpack.c.h.b16 %v243
    %v830 = vunpack.c.l.b16 %v244
    %v831 = vunpack.c.h.b16 %v244
    %v832 = vunpack.c.l.b16 %v245
    %v833 = vunpack.c.h.b16 %v245
    %v834 = vunpack.c.l.b16 %v246
    %v835 = vunpack.c.h.b16 %v246
    %v836 = vunpack.c.l.b16 %v247
    %v837 = vunpack.c.h.b16 %v247
    %v838 = vunpack.c.l.b16 %v248
    %v839 = vunpack.c.h.b16 %v248
    %v840 = vunpack.c.l.b16 %v249
    %v841 = vunpack.c.h.b16 %v249
    %v842 = vunpack.c.l.b16 %v250
    %v843 = vunpack.c.h.b16 %v250
    %v844 = vunpack.c.l.b16 %v251
    %v845 = vunpack.c.h.b16 %v251
    %v846 = vunpack.c.l.b16 %v252
    %v847 = vunpack.c.h.b16 %v252
    %v848 = vunpack.c.l.b16 %v253
    %v849 = vunpack.c.h.b16 %v253
    %v850 = vunpack.c.l.b16 %v254
    %v851 = vunpack.c.h.b16 %v254
    %v852 = vunpack.c.l.b16 %v255
    %v853 = vunpack.c.h.b16 %v255
    %v854 = vunpack.c.l.b16 %v256
    %v855 = vunpack.c.h.b16 %v256
    %v856 = vunpack.c.l.b16 %v257
    %v857 = vunpack.c.h.b16 %v257
    %v858 = vunpack.c.l.b16 %v258
    %v859 = vunpack.c.h.b16 %v258
    %v860 = vunpack.c.l.b16 %v259
    %v861 = vunpack.c.h.b16 %v259
    %v862 = vunpack.c.l.b16 %v260
    %v863 = vunpack.c.h.b16 %v260
    %v864 = vunpack.c.l.b16 %v261
    %v865 = vunpack.c.h.b16 %v261
    %v866 = vunpack.c.l.b16 %v262
    %v867 = vunpack.c.h.b16 %v262
    %v868 = vunpack.c.l.b16 %v263
    %v869 = vunpack.c.h.b16 %v263
    %v870 = vunpack.c.l.b16 %v264
    %v871 = vunpack.c.h.b16 %v264
    %v872 = vunpack.c.l.b16 %v265
    %v873 = vunpack.c.h.b16 %v265
    %v874 = vunpack.c.l.b16 %v266
    %v875 = vunpack.c.h.b16 %v266
    %v876 = vunpack.c.l.b16 %v267
    %v877 = vunpack.c.h.b16 %v267
    %v878 = vunpack.c.l.b16 %v268
    %v879 = vunpack.c.h.b16 %v268
    %v880 = vunpack.c.l.b16 %v269
    %v881 = vunpack.c.h.b16 %v269
    %v882 = vunpack.c.l.b16 %v270
    %v883 = vunpack.c.h.b16 %v270
    %v884 = vunpack.c.l.b16 %v271
    %v885 = vunpack.c.h.b16 %v271
    %v886 = vunpack.c.l.b16 %v272
    %v887 = vunpack.c.h.b16 %v272
    %v888 = vunpack.c.l.b16 %v273
    %v889 = vunpack.c.h.b16 %v273
    %v890 = vunpack.c.l.b16 %v274
    %v891 = vunpack.c.h.b16 %v274
    %v892 = vunpack.c.l.b16 %v275
    %v893 = vunpack.c.h.b16 %v275
    %v894 = vunpack.c.l.b16 %v276
    %v895 = vunpack.c.h.b16 %v276
    %v896 = vunpack.c.l.b16 %v277
    %v897 = vunpack.c.h.b16 %v277
    %v898 = vunpack.c.l.b16 %v278
    %v899 = vunpack.c.h.b16 %v278
    %v900 = vunpack.c.l.b16 %v279
    %v901 = vunpack.c.h.b16 %v279
    %v902 = vunpack.c.l.b16 %v280
    %v903 = vunpack.c.h.b16 %v280
    %v904 = vunpack.c.l.b16 %v281
    %v905 = vunpack.c.h.b16 %v281
    %v906 = vunpack.c.l.b16 %v282
    %v907 = vunpack.c.h.b16 %v282
    %v908 = vunpack.c.l.b16 %v283
    %v909 = vunpack.c.h.b16 %v283
    %v910 = vunpack.c.l.b16 %v284
    %v911 = vunpack.c.h.b16 %v284
    %v912 = vunpack.c.l.b16 %v285
    %v913 = vunpack.c.h.b16 %v285
    %v914 = vunpack.c.l.b16 %v286
    %v915 = vunpack.c.h.b16 %v286
    %v916 = vunpack.c.l.b16 %v287
    %v917 = vunpack.c.h.b16 %v287
    %v918 = vunpack.c.l.b16 %v288
    %v919 = vunpack.c.h.b16 %v288
    %v920 = vunpack.c.l.b16 %v289
    %v921 = vunpack.c.h.b16 %v289
    %v922 = vunpack.c.l.b16 %v290
    %v923 = vunpack.c.h.b16 %v290
    %v924 = vunpack.c.l.b16 %v291
    %v925 = vunpack.c.h.b16 %v291
    %v926 = vpack.c.b16 %v538, %v534
    %v927 = vpack.c.b16 %v539, %v535
    %v928 = vpack.c.b16 %v540, %v536
    %v929 = vpack.c.b16 %v541, %v537
    %v930 = vpack.c.b16 %v546, %v542
    %v931 = vpack.c.b16 %v547, %v543
    %v932 = vpack.c.b16 %v548, %v544
    %v933 = vpack.c.b16 %v549, %v545
    %v934 = vpack.c.b16 %v554, %v550
    %v935 = vpack.c.b16 %v555, %v551
    %v936 = vpack.c.b16 %v556, %v552
    %v937 = vpack.c.b16 %v557, %v553
    %v938 = vpack.c.b16 %v562, %v558
    %v939 = vpack.c.b16 %v563, %v559
    %v940 = vpack.c.b16 %v564, %v560
    %v941 = vpack.c.b16 %v565, %v561
    %v942 = vpack.c.b16 %v570, %v566
    %v943 = vpack.c.b16 %v571, %v567
    %v944 = vpack.c.b16 %v572, %v568
    %v945 = vpack.c.b16 %v573, %v569
    %v946 = vpack.c.b16 %v578, %v574
    %v947 = vpack.c.b16 %v579, %v575
    %v948 = vpack.c.b16 %v580, %v576
    %v949 = vpack.c.b16 %v581, %v577
    %v950 = vpack.c.b16 %v586, %v582
    %v951 = vpack.c.b16 %v587, %v583
    %v952 = vpack.c.b16 %v588, %v584
    %v953 = vpack.c.b16 %v589, %v585
    %v954 = vpack.c.b16 %v594, %v590
    %v955 = vpack.c.b16 %v595, %v591
    %v956 = vpack.c.b16 %v596, %v592
    %v957 = vpack.c.b16 %v597, %v593
    %v958 = vpack.c.b16 %v602, %v598
    %v959 = vpack.c.b16 %v603, %v599
    %v960 = vpack.c.b16 %v604, %v600
    %v961 = vpack.c.b16 %v605, %v601
    %v962 = vpack.c.b16 %v610, %v606
    %v963 = vpack.c.b16 %v611, %v607
    %v964 = vpack.c.b16 %v612, %v608
    %v965 = vpack.c.b16 %v613, %v609
    %v966 = vpack.c.b16 %v618, %v614
    %v967 = vpack.c.b16 %v619, %v615
    %v968 = vpack.c.b16 %v620, %v616
    %v969 = vpack.c.b16 %v621, %v617
    %v970 = vpack.c.b16 %v626, %v622
    %v971 = vpack.c.b16 %v627, %v623
    %v972 = vpack.c.b16 %v628, %v624
    %v973 = vpack.c.b16 %v629, %v625
    %v974 = vpack.c.b16 %v634, %v630
    %v975 = vpack.c.b16 %v635, %v631
    %v976 = vpack.c.b16 %v636, %v632
    %v977 = vpack.c.b16 %v637, %v633
    %v978 = vpack.c.b16 %v642, %v638
    %v979 = vpack.c.b16 %v643, %v639
    %v980 = vpack.c.b16 %v644, %v640
    %v981 = vpack.c.b16 %v645, %v641
    %v982 = vpack.c.b16 %v650, %v646
    %v983 = vpack.c.b16 %v651, %v647
    %v984 = vpack.c.b16 %v652, %v648
    %v985 = vpack.c.b16 %v653, %v649
    %v986 = vpack.c.b16 %v658, %v654
    %v987 = vpack.c.b16 %v659, %v655
    %v988 = vpack.c.b16 %v660, %v656
    %v989 = vpack.c.b16 %v661, %v657
    %v990 = vpack.c.b16 %v666, %v662
    %v991 = vpack.c.b16 %v667, %v663
    %v992 = vpack.c.b16 %v668, %v664
    %v993 = vpack.c.b16 %v669, %v665
    %v994 = vpack.c.b16 %v674, %v670
    %v995 = vpack.c.b16 %v675, %v671
    %v996 = vpack.c.b16 %v676, %v672
    %v997 = vpack.c.b16 %v677, %v673
    %v998 = vpack.c.b16 %v682, %v678
    %v999 = vpack.c.b16 %v683, %v679
    %v1000 = vpack.c.b16 %v684, %v680
    %v1001 = vpack.c.b16 %v685, %v681
    %v1002 = vpack.c.b16 %v690, %v686
    %v1003 = vpack.c.b16 %v691, %v687
    %v1004 = vpack.c.b16 %v692, %v688
    %v1005 = vpack.c.b16 %v693, %v689
    %v1006 = vpack.c.b16 %v698, %v694
    %v1007 = vpack.c.b16 %v699, %v695
    %v1008 = vpack.c.b16 %v700, %v696
    %v1009 = vpack.c.b16 %v701, %v697
    %v1010 = vpack.c.b16 %v706, %v702
    %v1011 = vpack.c.b16 %v707, %v703
    %v1012 = vpack.c.b16 %v708, %v704
    %v1013 = vpack.c.b16 %v709, %v705
    %v1014 = vpack.c.b16 %v714, %v710
    %v1015 = vpack.c.b16 %v715, %v711
    %v1016 = vpack.c.b16 %v716, %v712
    %v1017 = vpack.c.b16 %v717, %v713
    %v1018 = vpack.c.b16 %v722, %v718
    %v1019 = vpack.c.b16 %v723, %v719
    %v1020 = vpack.c.b16 %v724, %v720
    %v1021 = vpack.c.b16 %v725, %v721
    %v1022 = vpack.c.b16 %v730, %v726
    %v1023 = vpack.c.b16 %v731, %v727
    %v1024 = vpack.c.b16 %v732, %v728
    %v1025 = vpack.c.b16 %v733, %v729
    %v1026 = vpack.c.b16 %v738, %v734
    %v1027 = vpack.c.b16 %v739, %v735
    %v1028 = vpack.c.b16 %v740, %v736
    %v1029 = vpack.c.b16 %v741, %v737
    %v1030 = vpack.c.b16 %v746, %v742
    %v1031 = vpack.c.b16 %v747, %v743
    %v1032 = vpack.c.b16 %v748, %v744
    %v1033 = vpack.c.b16 %v749, %v745
    %v1034 = vpack.c.b16 %v754, %v750
    %v1035 = vpack.c.b16 %v755, %v751
    %v1036 = vpack.c.b16 %v756, %v752
    %v1037 = vpack.c.b16 %v757, %v753
    %v1038 = vpack.c.b16 %v762, %v758
    %v1039 = vpack.c.b16 %v763, %v759
    %v1040 = vpack.c.b16 %v764, %v760
    %v1041 = vpack.c.b16 %v765, %v761
    %v1042 = vpack.c.b16 %v770, %v766
    %v1043 = vpack.c.b16 %v771, %v767
    %v1044 = vpack.c.b16 %v772, %v768
    %v1045 = vpack.c.b16 %v773, %v769
    %v1046 = vpack.c.b16 %v778, %v774
    %v1047 = vpack.c.b16 %v779, %v775
    %v1048 = vpack.c.b16 %v780, %v776
    %v1049 = vpack.c.b16 %v781, %v777
    %v1050 = vpack.c.b16 %v786, %v782
    %v1051 = vpack.c.b16 %v787, %v783
    %v1052 = vpack.c.b16 %v788, %v784
    %v1053 = vpack.c.b16 %v789, %v785
    %v1054 = vpack.c.b16 %v794, %v790
    %v1055 = vpack.c.b16 %v795, %v791
    %v1056 = vpack.c.b16 %v796, %v792
    %v1057 = vpack.c.b16 %v797, %v793
    %v1058 = vpack.c.b16 %v802, %v798
    %v1059 = vpack.c.b16 %v803, %v799
    %v1060 = vpack.c.b16 %v804, %v800
    %v1061 = vpack.c.b16 %v805, %v801
    %v1062 = vpack.c.b16 %v810, %v806
    %v1063 = vpack.c.b16 %v811, %v807
    %v1064 = vpack.c.b16 %v812, %v808
    %v1065 = vpack.c.b16 %v813, %v809
    %v1066 = vpack.c.b16 %v818, %v814
    %v1067 = vpack.c.b16 %v819, %v815
    %v1068 = vpack.c.b16 %v820, %v816
    %v1069 = vpack.c.b16 %v821, %v817
    %v1070 = vpack.c.b16 %v826, %v822
    %v1071 = vpack.c.b16 %v827, %v823
    %v1072 = vpack.c.b16 %v828, %v824
    %v1073 = vpack.c.b16 %v829, %v825
    %v1074 = vpack.c.b16 %v834, %v830
    %v1075 = vpack.c.b16 %v835, %v831
    %v1076 = vpack.c.b16 %v836, %v832
    %v1077 = vpack.c.b16 %v837, %v833
    %v1078 = vpack.c.b16 %v842, %v838
    %v1079 = vpack.c.b16 %v843, %v839
    %v1080 = vpack.c.b16 %v844, %v840
    %v1081 = vpack.c.b16 %v845, %v841
    %v1082 = vpack.c.b16 %v850, %v846
    %v1083 = vpack.c.b16 %v851, %v847
    %v1084 = vpack.c.b16 %v852, %v848
    %v1085 = vpack.c.b16 %v853, %v849
    %v1086 = vpack.c.b16 %v858, %v854
    %v1087 = vpack.c.b16 %v859, %v855
    %v1088 = vpack.c.b16 %v860, %v856
    %v1089 = vpack.c.b16 %v861, %v857
    %v1090 = vpack.c.b16 %v866, %v862
    %v1091 = vpack.c.b16 %v867, %v863
    %v1092 = vpack.c.b16 %v868, %v864
    %v1093 = vpack.c.b16 %v869, %v865
    %v1094 = vpack.c.b16 %v874, %v870
    %v1095 = vpack.c.b16 %v875, %v871
    %v1096 = vpack.c.b16 %v876, %v872
    %v1097 = vpack.c.b16 %v877, %v873
    %v1098 = vpack.c.b16 %v882, %v878
    %v1099 = vpack.c.b16 %v883, %v879
    %v1100 = vpack.c.b16 %v884, %v880
    %v1101 = vpack.c.b16 %v885, %v881
    %v1102 = vpack.c.b16 %v890, %v886
    %v1103 = vpack.c.b16 %v891, %v887
    %v1104 = vpack.c.b16 %v892, %v888
    %v1105 = vpack.c.b16 %v893, %v889
    %v1106 = vpack.c.b16 %v898, %v894
    %v1107 = vpack.c.b16 %v899, %v895
    %v1108 = vpack.c.b16 %v900, %v896
    %v1109 = vpack.c.b16 %v901, %v897
    %v1110 = vpack.c.b16 %v906, %v902
    %v1111 = vpack.c.b16 %v907, %v903
    %v1112 = vpack.c.b16 %v908, %v904
    %v1113 = vpack.c.b16 %v909, %v905
    %v1114 = vpack.c.b16 %v914, %v910
    %v1115 = vpack.c.b16 %v915, %v911
    %v1116 = vpack.c.b16 %v916, %v912
    %v1117 = vpack.c.b16 %v917, %v913
    %v1118 = vpack.c.b16 %v922, %v918
    %v1119 = vpack.c.b16 %v923, %v919
    %v1120 = vpack.c.b16 %v924, %v920
    %v1121 = vpack.c.b16 %v925, %v921
    %vm1318 = vcmask 130048
    %v1320 = vsel %vm1318, %v331, 0
    %1322 = vmatprep.subr.bf16.mxu0 %v955
    %1323 = vmatpush1.bf16.msra.mxu0 %v954
    %1324 = vmatprep.subr.bf16.mxu0 %v951
    %1325 = vmatpush1.bf16.msra.mxu0 %v950
    %1326 = vmatprep.subr.bf16.mxu0 %v947
    %1327 = vmatpush1.bf16.msra.mxu0 %v946
    %1328 = vmatprep.subr.bf16.mxu0 %v943
    %1329 = vmatpush1.bf16.msra.mxu0 %v942
    %1330 = vmatprep.subr.bf16.mxu0 %v939
    %1331 = vmatpush1.bf16.msra.mxu0 %v938
    %1332 = vmatprep.subr.bf16.mxu0 %v935
    %1333 = vmatpush1.bf16.msra.mxu0 %v934
    %1334 = vmatprep.subr.bf16.mxu0 %v931
    %1335 = vmatpush1.bf16.msra.mxu0 %v930
    %1336 = vmatprep.subr.bf16.mxu0 %v927
    %1337 = vmatpush1.bf16.msra.mxu0 %v926
    %1338 = vmatprep.subr.bf16.mxu0 %v987
    %1339 = vmatpush2.bf16.msra.mxu0 %v986
    %1340 = vmatprep.subr.bf16.mxu0 %v983
    %1341 = vmatpush2.bf16.msra.mxu0 %v982
    %1342 = vmatprep.subr.bf16.mxu0 %v979
    %1343 = vmatpush2.bf16.msra.mxu0 %v978
    %1344 = vmatprep.subr.bf16.mxu0 %v975
    %1345 = vmatpush2.bf16.msra.mxu0 %v974
    %1346 = vmatprep.subr.bf16.mxu0 %v971
    %1347 = vmatpush2.bf16.msra.mxu0 %v970
    %1348 = vmatprep.subr.bf16.mxu0 %v967
    %1349 = vmatpush2.bf16.msra.mxu0 %v966
    %1350 = vmatprep.subr.bf16.mxu0 %v963
    %1351 = vmatpush2.bf16.msra.mxu0 %v962
    %1352 = vmatprep.subr.bf16.mxu0 %v959
    %1353 = vmatpush2.bf16.msra.mxu0 %v958
    %1354 = vmatprep.mubr.bf16.mxu0 %v326
    %1355 = vmatmul.mubr.bf16.gmra.mxu0 %v325
    %v1356 = vpop.f32.mrf.mxu0
    %v1357 = vadd.f32 %v297, %v1356
    %v1358 = vpop.f32.mrf.mxu0
    %v1359 = vadd.f32 %v301, %v1358
    %v1360 = vpop.f32.mrf.mxu0
    %v1361 = vpop.f32.mrf.mxu0
    %1362 = vdwg.mxu0
    %1363 = vmatprep.subr.bf16.mxu0 %v1019
    %1364 = vmatpush1.bf16.msra.mxu0 %v1018
    %1365 = vmatprep.subr.bf16.mxu0 %v1015
    %1366 = vmatpush1.bf16.msra.mxu0 %v1014
    %1367 = vmatprep.subr.bf16.mxu0 %v1011
    %1368 = vmatpush1.bf16.msra.mxu0 %v1010
    %1369 = vmatprep.subr.bf16.mxu0 %v1007
    %1370 = vmatpush1.bf16.msra.mxu0 %v1006
    %1371 = vmatprep.subr.bf16.mxu0 %v1003
    %1372 = vmatpush1.bf16.msra.mxu0 %v1002
    %1373 = vmatprep.subr.bf16.mxu0 %v999
    %1374 = vmatpush1.bf16.msra.mxu0 %v998
    %1375 = vmatprep.subr.bf16.mxu0 %v995
    %1376 = vmatpush1.bf16.msra.mxu0 %v994
    %1377 = vmatprep.subr.bf16.mxu0 %v991
    %1378 = vmatpush1.bf16.msra.mxu0 %v990
    %1379 = vmatprep.subr.bf16.mxu0 %v1051
    %1380 = vmatpush2.bf16.msra.mxu0 %v1050
    %1381 = vmatprep.subr.bf16.mxu0 %v1047
    %1382 = vmatpush2.bf16.msra.mxu0 %v1046
    %1383 = vmatprep.subr.bf16.mxu0 %v1043
    %1384 = vmatpush2.bf16.msra.mxu0 %v1042
    %1385 = vmatprep.subr.bf16.mxu0 %v1039
    %1386 = vmatpush2.bf16.msra.mxu0 %v1038
    %1387 = vmatprep.subr.bf16.mxu0 %v1035
    %1388 = vmatpush2.bf16.msra.mxu0 %v1034
    %1389 = vmatprep.subr.bf16.mxu0 %v1031
    %1390 = vmatpush2.bf16.msra.mxu0 %v1030
    %1391 = vmatprep.subr.bf16.mxu0 %v1027
    %1392 = vmatpush2.bf16.msra.mxu0 %v1026
    %1393 = vmatprep.subr.bf16.mxu0 %v1023
    %1394 = vmatpush2.bf16.msra.mxu0 %v1022
    %1395 = vmatprep.mubr.bf16.mxu0 %v328
    %1396 = vmatmul.mubr.bf16.gmra.mxu0 %v327
    %v1397 = vpop.f32.mrf.mxu0
    %v1398 = vadd.f32 %v1357, %v1397
    %v1399 = vpop.f32.mrf.mxu0
    %v1400 = vadd.f32 %v1359, %v1399
    %v1401 = vpop.f32.mrf.mxu0
    %v1402 = vpop.f32.mrf.mxu0
    %1403 = vdwg.mxu0
    %1404 = vmatprep.subr.bf16.mxu0 %v1083
    %1405 = vmatpush1.bf16.msra.mxu0 %v1082
    %1406 = vmatprep.subr.bf16.mxu0 %v1079
    %1407 = vmatpush1.bf16.msra.mxu0 %v1078
    %1408 = vmatprep.subr.bf16.mxu0 %v1075
    %1409 = vmatpush1.bf16.msra.mxu0 %v1074
    %1410 = vmatprep.subr.bf16.mxu0 %v1071
    %1411 = vmatpush1.bf16.msra.mxu0 %v1070
    %1412 = vmatprep.subr.bf16.mxu0 %v1067
    %1413 = vmatpush1.bf16.msra.mxu0 %v1066
    %1414 = vmatprep.subr.bf16.mxu0 %v1063
    %1415 = vmatpush1.bf16.msra.mxu0 %v1062
    %1416 = vmatprep.subr.bf16.mxu0 %v1059
    %1417 = vmatpush1.bf16.msra.mxu0 %v1058
    %1418 = vmatprep.subr.bf16.mxu0 %v1055
    %1419 = vmatpush1.bf16.msra.mxu0 %v1054
    %1420 = vmatprep.subr.bf16.mxu0 %v1115
    %1421 = vmatpush2.bf16.msra.mxu0 %v1114
    %1422 = vmatprep.subr.bf16.mxu0 %v1111
    %1423 = vmatpush2.bf16.msra.mxu0 %v1110
    %1424 = vmatprep.subr.bf16.mxu0 %v1107
    %1425 = vmatpush2.bf16.msra.mxu0 %v1106
    %1426 = vmatprep.subr.bf16.mxu0 %v1103
    %1427 = vmatpush2.bf16.msra.mxu0 %v1102
    %1428 = vmatprep.subr.bf16.mxu0 %v1099
    %1429 = vmatpush2.bf16.msra.mxu0 %v1098
    %1430 = vmatprep.subr.bf16.mxu0 %v1095
    %1431 = vmatpush2.bf16.msra.mxu0 %v1094
    %1432 = vmatprep.subr.bf16.mxu0 %v1091
    %1433 = vmatpush2.bf16.msra.mxu0 %v1090
    %1434 = vmatprep.subr.bf16.mxu0 %v1087
    %1435 = vmatpush2.bf16.msra.mxu0 %v1086
    %1436 = vmatprep.mubr.bf16.mxu0 %v330
    %1437 = vmatmul.mubr.bf16.gmra.mxu0 %v329
    %v1438 = vpop.f32.mrf.mxu0
    %v1439 = vadd.f32 %v1398, %v1438
    %v1440 = vpop.f32.mrf.mxu0
    %v1441 = vadd.f32 %v1400, %v1440
    %v1442 = vpop.f32.mrf.mxu0
    %v1443 = vpop.f32.mrf.mxu0
    %1444 = vdwg.mxu0
    %1445 = vmatprep.subr.bf16.mxu0 0
    %1446 = vmatpush1.bf16.msra.mxu0 0
    %1447 = vmatprep.subr.bf16.mxu0 0
    %1448 = vmatpush1.bf16.msra.mxu0 0
    %1449 = vmatprep.subr.bf16.mxu0 0
    %1450 = vmatpush1.bf16.msra.mxu0 0
    %1451 = vmatprep.subr.bf16.mxu0 0
    %1452 = vmatpush1.bf16.msra.mxu0 0
    %1453 = vmatprep.subr.bf16.mxu0 0
    %1454 = vmatpush1.bf16.msra.mxu0 0
    %1455 = vmatprep.subr.bf16.mxu0 0
    %1456 = vmatpush1.bf16.msra.mxu0 0
    %1457 = vmatprep.subr.bf16.mxu0 0
    %1458 = vmatpush1.bf16.msra.mxu0 0
    %1459 = vmatprep.subr.bf16.mxu0 %v1119
    %1460 = vmatpush1.bf16.msra.mxu0 %v1118
    %1461 = vmatprep.subr.bf16.mxu0 0
    %1462 = vmatpush2.bf16.msra.mxu0 0
    %1463 = vmatprep.subr.bf16.mxu0 0
    %1464 = vmatpush2.bf16.msra.mxu0 0
    %1465 = vmatprep.subr.bf16.mxu0 0
    %1466 = vmatpush2.bf16.msra.mxu0 0
    %1467 = vmatprep.subr.bf16.mxu0 0
    %1468 = vmatpush2.bf16.msra.mxu0 0
    %1469 = vmatprep.subr.bf16.mxu0 0
    %1470 = vmatpush2.bf16.msra.mxu0 0
    %1471 = vmatprep.subr.bf16.mxu0 0
    %1472 = vmatpush2.bf16.msra.mxu0 0
    %1473 = vmatprep.subr.bf16.mxu0 0
    %1474 = vmatpush2.bf16.msra.mxu0 0
    %1475 = vmatprep.subr.bf16.mxu0 0
    %1476 = vmatpush2.bf16.msra.mxu0 0
    %1477 = vmatprep.mubr.bf16.mxu0 0
    %1478 = vmatmul.mubr.bf16.gmra.mxu0 %v1320
    %v1479 = vpop.f32.mrf.mxu0
    %v1480 = vadd.f32 %v1439, %v1479
    %v1481 = vpop.f32.mrf.mxu0
    %v1482 = vadd.f32 %v1441, %v1481
    %v1483 = vpop.f32.mrf.mxu0
    %v1484 = vpop.f32.mrf.mxu0
    %1485 = vdwg.mxu0
    %1486 = vmatprep.subr.bf16.mxu0 %v957
    %1487 = vmatpush1.bf16.msra.mxu0 %v956
    %1488 = vmatprep.subr.bf16.mxu0 %v953
    %1489 = vmatpush1.bf16.msra.mxu0 %v952
    %1490 = vmatprep.subr.bf16.mxu0 %v949
    %1491 = vmatpush1.bf16.msra.mxu0 %v948
    %1492 = vmatprep.subr.bf16.mxu0 %v945
    %1493 = vmatpush1.bf16.msra.mxu0 %v944
    %1494 = vmatprep.subr.bf16.mxu0 %v941
    %1495 = vmatpush1.bf16.msra.mxu0 %v940
    %1496 = vmatprep.subr.bf16.mxu0 %v937
    %1497 = vmatpush1.bf16.msra.mxu0 %v936
    %1498 = vmatprep.subr.bf16.mxu0 %v933
    %1499 = vmatpush1.bf16.msra.mxu0 %v932
    %1500 = vmatprep.subr.bf16.mxu0 %v929
    %1501 = vmatpush1.bf16.msra.mxu0 %v928
    %1502 = vmatprep.subr.bf16.mxu0 %v989
    %1503 = vmatpush2.bf16.msra.mxu0 %v988
    %1504 = vmatprep.subr.bf16.mxu0 %v985
    %1505 = vmatpush2.bf16.msra.mxu0 %v984
    %1506 = vmatprep.subr.bf16.mxu0 %v981
    %1507 = vmatpush2.bf16.msra.mxu0 %v980
    %1508 = vmatprep.subr.bf16.mxu0 %v977
    %1509 = vmatpush2.bf16.msra.mxu0 %v976
    %1510 = vmatprep.subr.bf16.mxu0 %v973
    %1511 = vmatpush2.bf16.msra.mxu0 %v972
    %1512 = vmatprep.subr.bf16.mxu0 %v969
    %1513 = vmatpush2.bf16.msra.mxu0 %v968
    %1514 = vmatprep.subr.bf16.mxu0 %v965
    %1515 = vmatpush2.bf16.msra.mxu0 %v964
    %1516 = vmatprep.subr.bf16.mxu0 %v961
    %1517 = vmatpush2.bf16.msra.mxu0 %v960
    %1518 = vmatprep.mubr.bf16.mxu0 %v326
    %1519 = vmatmul.mubr.bf16.gmra.mxu0 %v325
    %v1520 = vpop.f32.mrf.mxu0
    %v1521 = vadd.f32 %v305, %v1520
    %v1522 = vpop.f32.mrf.mxu0
    %v1523 = vadd.f32 %v309, %v1522
    %v1524 = vpop.f32.mrf.mxu0
    %v1525 = vpop.f32.mrf.mxu0
    %1526 = vdwg.mxu0
    %1527 = vmatprep.subr.bf16.mxu0 %v1021
    %1528 = vmatpush1.bf16.msra.mxu0 %v1020
    %1529 = vmatprep.subr.bf16.mxu0 %v1017
    %1530 = vmatpush1.bf16.msra.mxu0 %v1016
    %1531 = vmatprep.subr.bf16.mxu0 %v1013
    %1532 = vmatpush1.bf16.msra.mxu0 %v1012
    %1533 = vmatprep.subr.bf16.mxu0 %v1009
    %1534 = vmatpush1.bf16.msra.mxu0 %v1008
    %1535 = vmatprep.subr.bf16.mxu0 %v1005
    %1536 = vmatpush1.bf16.msra.mxu0 %v1004
    %1537 = vmatprep.subr.bf16.mxu0 %v1001
    %1538 = vmatpush1.bf16.msra.mxu0 %v1000
    %1539 = vmatprep.subr.bf16.mxu0 %v997
    %1540 = vmatpush1.bf16.msra.mxu0 %v996
    %1541 = vmatprep.subr.bf16.mxu0 %v993
    %1542 = vmatpush1.bf16.msra.mxu0 %v992
    %1543 = vmatprep.subr.bf16.mxu0 %v1053
    %1544 = vmatpush2.bf16.msra.mxu0 %v1052
    %1545 = vmatprep.subr.bf16.mxu0 %v1049
    %1546 = vmatpush2.bf16.msra.mxu0 %v1048
    %1547 = vmatprep.subr.bf16.mxu0 %v1045
    %1548 = vmatpush2.bf16.msra.mxu0 %v1044
    %1549 = vmatprep.subr.bf16.mxu0 %v1041
    %1550 = vmatpush2.bf16.msra.mxu0 %v1040
    %1551 = vmatprep.subr.bf16.mxu0 %v1037
    %1552 = vmatpush2.bf16.msra.mxu0 %v1036
    %1553 = vmatprep.subr.bf16.mxu0 %v1033
    %1554 = vmatpush2.bf16.msra.mxu0 %v1032
    %1555 = vmatprep.subr.bf16.mxu0 %v1029
    %1556 = vmatpush2.bf16.msra.mxu0 %v1028
    %1557 = vmatprep.subr.bf16.mxu0 %v1025
    %1558 = vmatpush2.bf16.msra.mxu0 %v1024
    %1559 = vmatprep.mubr.bf16.mxu0 %v328
    %1560 = vmatmul.mubr.bf16.gmra.mxu0 %v327
    %v1561 = vpop.f32.mrf.mxu0
    %v1562 = vadd.f32 %v1521, %v1561
    %v1563 = vpop.f32.mrf.mxu0
    %v1564 = vadd.f32 %v1523, %v1563
    %v1565 = vpop.f32.mrf.mxu0
    %v1566 = vpop.f32.mrf.mxu0
    %1567 = vdwg.mxu0
    %1568 = vmatprep.subr.bf16.mxu0 %v1085
    %1569 = vmatpush1.bf16.msra.mxu0 %v1084
    %1570 = vmatprep.subr.bf16.mxu0 %v1081
    %1571 = vmatpush1.bf16.msra.mxu0 %v1080
    %1572 = vmatprep.subr.bf16.mxu0 %v1077
    %1573 = vmatpush1.bf16.msra.mxu0 %v1076
    %1574 = vmatprep.subr.bf16.mxu0 %v1073
    %1575 = vmatpush1.bf16.msra.mxu0 %v1072
    %1576 = vmatprep.subr.bf16.mxu0 %v1069
    %1577 = vmatpush1.bf16.msra.mxu0 %v1068
    %1578 = vmatprep.subr.bf16.mxu0 %v1065
    %1579 = vmatpush1.bf16.msra.mxu0 %v1064
    %1580 = vmatprep.subr.bf16.mxu0 %v1061
    %1581 = vmatpush1.bf16.msra.mxu0 %v1060
    %1582 = vmatprep.subr.bf16.mxu0 %v1057
    %1583 = vmatpush1.bf16.msra.mxu0 %v1056
    %1584 = vmatprep.subr.bf16.mxu0 %v1117
    %1585 = vmatpush2.bf16.msra.mxu0 %v1116
    %1586 = vmatprep.subr.bf16.mxu0 %v1113
    %1587 = vmatpush2.bf16.msra.mxu0 %v1112
    %1588 = vmatprep.subr.bf16.mxu0 %v1109
    %1589 = vmatpush2.bf16.msra.mxu0 %v1108
    %1590 = vmatprep.subr.bf16.mxu0 %v1105
    %1591 = vmatpush2.bf16.msra.mxu0 %v1104
    %1592 = vmatprep.subr.bf16.mxu0 %v1101
    %1593 = vmatpush2.bf16.msra.mxu0 %v1100
    %1594 = vmatprep.subr.bf16.mxu0 %v1097
    %1595 = vmatpush2.bf16.msra.mxu0 %v1096
    %1596 = vmatprep.subr.bf16.mxu0 %v1093
    %1597 = vmatpush2.bf16.msra.mxu0 %v1092
    %1598 = vmatprep.subr.bf16.mxu0 %v1089
    %1599 = vmatpush2.bf16.msra.mxu0 %v1088
    %1600 = vmatprep.mubr.bf16.mxu0 %v330
    %1601 = vmatmul.mubr.bf16.gmra.mxu0 %v329
    %v1602 = vpop.f32.mrf.mxu0
    %v1603 = vadd.f32 %v1562, %v1602
    %v1604 = vpop.f32.mrf.mxu0
    %v1605 = vadd.f32 %v1564, %v1604
    %v1606 = vpop.f32.mrf.mxu0
    %v1607 = vpop.f32.mrf.mxu0
    %1608 = vdwg.mxu0
    %1609 = vmatprep.subr.bf16.mxu0 0
    %1610 = vmatpush1.bf16.msra.mxu0 0
    %1611 = vmatprep.subr.bf16.mxu0 0
    %1612 = vmatpush1.bf16.msra.mxu0 0
    %1613 = vmatprep.subr.bf16.mxu0 0
    %1614 = vmatpush1.bf16.msra.mxu0 0
    %1615 = vmatprep.subr.bf16.mxu0 0
    %1616 = vmatpush1.bf16.msra.mxu0 0
    %1617 = vmatprep.subr.bf16.mxu0 0
    %1618 = vmatpush1.bf16.msra.mxu0 0
    %1619 = vmatprep.subr.bf16.mxu0 0
    %1620 = vmatpush1.bf16.msra.mxu0 0
    %1621 = vmatprep.subr.bf16.mxu0 0
    %1622 = vmatpush1.bf16.msra.mxu0 0
    %1623 = vmatprep.subr.bf16.mxu0 %v1121
    %1624 = vmatpush1.bf16.msra.mxu0 %v1120
    %1625 = vmatprep.subr.bf16.mxu0 0
    %1626 = vmatpush2.bf16.msra.mxu0 0
    %1627 = vmatprep.subr.bf16.mxu0 0
    %1628 = vmatpush2.bf16.msra.mxu0 0
    %1629 = vmatprep.subr.bf16.mxu0 0
    %1630 = vmatpush2.bf16.msra.mxu0 0
    %1631 = vmatprep.subr.bf16.mxu0 0
    %1632 = vmatpush2.bf16.msra.mxu0 0
    %1633 = vmatprep.subr.bf16.mxu0 0
    %1634 = vmatpush2.bf16.msra.mxu0 0
    %1635 = vmatprep.subr.bf16.mxu0 0
    %1636 = vmatpush2.bf16.msra.mxu0 0
    %1637 = vmatprep.subr.bf16.mxu0 0
    %1638 = vmatpush2.bf16.msra.mxu0 0
    %1639 = vmatprep.subr.bf16.mxu0 0
    %1640 = vmatpush2.bf16.msra.mxu0 0
    %1641 = vmatprep.mubr.bf16.mxu0 0
    %1642 = vmatmul.mubr.bf16.gmra.mxu0 %v1320
    %v1643 = vpop.f32.mrf.mxu0
    %v1644 = vadd.f32 %v1603, %v1643
    %v1645 = vpop.f32.mrf.mxu0
    %v1646 = vadd.f32 %v1605, %v1645
    %v1647 = vpop.f32.mrf.mxu0
    %v1648 = vpop.f32.mrf.mxu0
    %1649 = vdwg.mxu0
    %v1650 = vmax.f32 %v1480, 0.0
    %v1651 = vmax.f32 %v1482, 0.0
    %v1652 = vmax.f32 %v1644, 0.0
    %v1653 = vmax.f32 %v1646, 0.0
    %v1654 = vpack.c.bf16 %v1650, %v1650
    %v1655 = vpack.c.bf16 %v1651, %v1651
    %v1656 = vpack.c.bf16 %v1652, %v1652
    %v1657 = vpack.c.bf16 %v1653, %v1653
    %v1658 = vld [vmem:[#allocation8] sm:$0xff]
    %v1659 = vld [vmem:[#allocation8 + $0x8] sm:$0xff]
    %v1660 = vld [vmem:[#allocation8 + $0x10] sm:$0xff]
    %v1661 = vld [vmem:[#allocation8 + $0x18] sm:$0xff]
    %v1662 = vld [vmem:[#allocation8 + $0x20] sm:$0xff]
    %v1663 = vld [vmem:[#allocation8 + $0x28] sm:$0xff]
    %v1664 = vld [vmem:[#allocation8 + $0x30] sm:$0xff]
    %v1665 = vld [vmem:[#allocation8 + $0x38] sm:$0xff]
    %v1666 = vld [vmem:[#allocation8 + $0x40] sm:$0xff]
    %v1667 = vld [vmem:[#allocation8 + $0x48] sm:$0xff]
    %v1668 = vld [vmem:[#allocation8 + $0x50] sm:$0xff]
    %v1669 = vld [vmem:[#allocation8 + $0x58] sm:$0xff]
    %v1670 = vld [vmem:[#allocation8 + $0x60] sm:$0xff]
    %v1671 = vld [vmem:[#allocation8 + $0x68] sm:$0xff]
    %v1672 = vld [vmem:[#allocation8 + $0x70] sm:$0xff]
    %v1673 = vld [vmem:[#allocation8 + $0x78] sm:$0xff]
    %v1674 = vld [vmem:[#allocation8 + $0x80] sm:$0xff]
    %v1675 = vld [vmem:[#allocation8 + $0x88] sm:$0xff]
    %v1676 = vld [vmem:[#allocation8 + $0x90] sm:$0xff]
    %v1677 = vld [vmem:[#allocation8 + $0x98] sm:$0xff]
    %v1678 = vld [vmem:[#allocation8 + $0xa0] sm:$0xff]
    %v1679 = vld [vmem:[#allocation8 + $0xa8] sm:$0xff]
    %v1680 = vld [vmem:[#allocation8 + $0xb0] sm:$0xff]
    %v1681 = vld [vmem:[#allocation8 + $0xb8] sm:$0xff]
    %v1682 = vld [vmem:[#allocation8 + $0xc0] sm:$0xff]
    %v1683 = vld [vmem:[#allocation8 + $0xc8] sm:$0xff]
    %v1684 = vld [vmem:[#allocation8 + $0xd0] sm:$0xff]
    %v1685 = vld [vmem:[#allocation8 + $0xd8] sm:$0xff]
    %v1686 = vld [vmem:[#allocation8 + $0xe0] sm:$0xff]
    %v1687 = vld [vmem:[#allocation8 + $0xe8] sm:$0xff]
    %v1688 = vld [vmem:[#allocation8 + $0xf0] sm:$0xff]
    %v1689 = vld [vmem:[#allocation8 + $0xf8] sm:$0xff]
    %v1690 = vld [vmem:[#allocation8 + $0x100] sm:$0xff]
    %v1691 = vld [vmem:[#allocation8 + $0x108] sm:$0xff]
    %v1692 = vld [vmem:[#allocation8 + $0x110] sm:$0xff]
    %v1693 = vld [vmem:[#allocation8 + $0x118] sm:$0xff]
    %v1694 = vld [vmem:[#allocation8 + $0x120] sm:$0xff]
    %v1695 = vld [vmem:[#allocation8 + $0x128] sm:$0xff]
    %v1696 = vld [vmem:[#allocation8 + $0x130] sm:$0xff]
    %v1697 = vld [vmem:[#allocation8 + $0x138] sm:$0xff]
    %v1698 = vld [vmem:[#allocation8 + $0x140] sm:$0xff]
    %v1699 = vld [vmem:[#allocation8 + $0x148] sm:$0xff]
    %v1700 = vld [vmem:[#allocation8 + $0x150] sm:$0xff]
    %v1701 = vld [vmem:[#allocation8 + $0x158] sm:$0xff]
    %v1702 = vld [vmem:[#allocation8 + $0x160] sm:$0xff]
    %v1703 = vld [vmem:[#allocation8 + $0x168] sm:$0xff]
    %v1704 = vld [vmem:[#allocation8 + $0x170] sm:$0xff]
    %v1705 = vld [vmem:[#allocation8 + $0x178] sm:$0xff]
    %v1706 = vld [vmem:[#allocation8 + $0x180] sm:$0xff]
    %v1707 = vld [vmem:[#allocation8 + $0x188] sm:$0xff]
    %v1708 = vld [vmem:[#allocation8 + $0x190] sm:$0xff]
    %v1709 = vld [vmem:[#allocation8 + $0x198] sm:$0xff]
    %v1710 = vld [vmem:[#allocation8 + $0x1a0] sm:$0xff]
    %v1711 = vld [vmem:[#allocation8 + $0x1a8] sm:$0xff]
    %v1712 = vld [vmem:[#allocation8 + $0x1b0] sm:$0xff]
    %v1713 = vld [vmem:[#allocation8 + $0x1b8] sm:$0xff]
    %v1714 = vld [vmem:[#allocation8 + $0x1c0] sm:$0xff]
    %v1715 = vld [vmem:[#allocation8 + $0x1c8] sm:$0xff]
    %v1716 = vld [vmem:[#allocation8 + $0x1d0] sm:$0xff]
    %v1717 = vld [vmem:[#allocation8 + $0x1d8] sm:$0xff]
    %v1718 = vld [vmem:[#allocation8 + $0x1e0] sm:$0xff]
    %v1719 = vld [vmem:[#allocation8 + $0x1e8] sm:$0xff]
    %v1720 = vld [vmem:[#allocation8 + $0x1f0] sm:$0xff]
    %v1721 = vld [vmem:[#allocation8 + $0x1f8] sm:$0xff]
    %v1722 = vld [vmem:[#allocation8 + $0x200] sm:$0xff]
    %v1723 = vld [vmem:[#allocation8 + $0x208] sm:$0xff]
    %v1724 = vld [vmem:[#allocation8 + $0x210] sm:$0xff]
    %v1725 = vld [vmem:[#allocation8 + $0x218] sm:$0xff]
    %v1726 = vld [vmem:[#allocation8 + $0x220] sm:$0xff]
    %v1727 = vld [vmem:[#allocation8 + $0x228] sm:$0xff]
    %v1728 = vld [vmem:[#allocation8 + $0x230] sm:$0xff]
    %v1729 = vld [vmem:[#allocation8 + $0x238] sm:$0xff]
    %v1730 = vld [vmem:[#allocation8 + $0x240] sm:$0xff]
    %v1731 = vld [vmem:[#allocation8 + $0x248] sm:$0xff]
    %v1732 = vld [vmem:[#allocation8 + $0x250] sm:$0xff]
    %v1733 = vld [vmem:[#allocation8 + $0x258] sm:$0xff]
    %v1734 = vld [vmem:[#allocation8 + $0x260] sm:$0xff]
    %v1735 = vld [vmem:[#allocation8 + $0x268] sm:$0xff]
    %v1736 = vld [vmem:[#allocation8 + $0x270] sm:$0xff]
    %v1737 = vld [vmem:[#allocation8 + $0x278] sm:$0xff]
    %v1738 = vld [vmem:[#allocation8 + $0x280] sm:$0xff]
    %v1739 = vld [vmem:[#allocation8 + $0x288] sm:$0xff]
    %v1740 = vld [vmem:[#allocation8 + $0x290] sm:$0xff]
    %v1741 = vld [vmem:[#allocation8 + $0x298] sm:$0xff]
    %v1742 = vld [vmem:[#allocation8 + $0x2a0] sm:$0xff]
    %v1743 = vld [vmem:[#allocation8 + $0x2a8] sm:$0xff]
    %v1744 = vld [vmem:[#allocation8 + $0x2b0] sm:$0xff]
    %v1745 = vld [vmem:[#allocation8 + $0x2b8] sm:$0xff]
    %v1746 = vld [vmem:[#allocation8 + $0x2c0] sm:$0xff]
    %v1747 = vld [vmem:[#allocation8 + $0x2c8] sm:$0xff]
    %v1748 = vld [vmem:[#allocation8 + $0x2d0] sm:$0xff]
    %v1749 = vld [vmem:[#allocation8 + $0x2d8] sm:$0xff]
    %v1750 = vld [vmem:[#allocation8 + $0x2e0] sm:$0xff]
    %v1751 = vld [vmem:[#allocation8 + $0x2e8] sm:$0xff]
    %v1752 = vld [vmem:[#allocation8 + $0x2f0] sm:$0xff]
    %v1753 = vld [vmem:[#allocation8 + $0x2f8] sm:$0xff]
    %v1754 = vld [vmem:[#allocation8 + $0x300] sm:$0xff]
    %v1755 = vld [vmem:[#allocation8 + $0x308] sm:$0xff]
    %v1756 = vld [vmem:[#allocation8 + $0x310] sm:$0xff]
    %v1757 = vld [vmem:[#allocation8 + $0x318] sm:$0xff]
    %v1758 = vld [vmem:[#allocation8 + $0x320] sm:$0xff]
    %v1759 = vld [vmem:[#allocation8 + $0x328] sm:$0xff]
    %v1760 = vld [vmem:[#allocation8 + $0x330] sm:$0xff]
    %v1761 = vld [vmem:[#allocation8 + $0x338] sm:$0xff]
    %v1762 = vld [vmem:[#allocation8 + $0x340] sm:$0xff]
    %v1763 = vld [vmem:[#allocation8 + $0x348] sm:$0xff]
    %v1764 = vld [vmem:[#allocation8 + $0x350] sm:$0xff]
    %v1765 = vld [vmem:[#allocation8 + $0x358] sm:$0xff]
    %v1766 = vld [vmem:[#allocation8 + $0x360] sm:$0xff]
    %v1767 = vld [vmem:[#allocation8 + $0x368] sm:$0xff]
    %v1768 = vld [vmem:[#allocation8 + $0x370] sm:$0xff]
    %v1769 = vld [vmem:[#allocation8 + $0x378] sm:$0xff]
    %v1770 = vld [vmem:[#allocation8 + $0x380] sm:$0xff]
    %v1771 = vld [vmem:[#allocation8 + $0x388] sm:$0xff]
    %v1772 = vld [vmem:[#allocation8 + $0x390] sm:$0xff]
    %v1773 = vld [vmem:[#allocation8 + $0x398] sm:$0xff]
    %v1774 = vld [vmem:[#allocation8 + $0x3a0] sm:$0xff]
    %v1775 = vld [vmem:[#allocation8 + $0x3a8] sm:$0xff]
    %v1776 = vld [vmem:[#allocation8 + $0x3b0] sm:$0xff]
    %v1777 = vld [vmem:[#allocation8 + $0x3b8] sm:$0xff]
    %v1778 = vld [vmem:[#allocation8 + $0x3c0] sm:$0xff]
    %v1779 = vld [vmem:[#allocation8 + $0x3c8] sm:$0xff]
    %v1780 = vld [vmem:[#allocation8 + $0x3d0] sm:$0xff]
    %v1781 = vld [vmem:[#allocation8 + $0x3d8] sm:$0xff]
    %v1782 = vld [vmem:[#allocation8 + $0x3e0] sm:$0xff]
    %v1783 = vld [vmem:[#allocation8 + $0x3e8] sm:$0xff]
    %v1784 = vld [vmem:[#allocation8 + $0x3f0] sm:$0xff]
    %v1785 = vld [vmem:[#allocation8 + $0x3f8] sm:$0xff]
    %v1786 = vld [vmem:[%s4] sm:$0xf]
    %v1788 = vlaneseq
    %v1789 = vshrl.u32 %v1788, 7
    %v1790 = vsub.s32 0, %v1789
    %v1791 = vrot.slane %v1786, %v1790
    %v1792 = vlaneseq
    %v1793 = vshrl.u32 %v1792, 7
    %v1794 = vsub.s32 1, %v1793
    %v1795 = vrot.slane %v1786, %v1794
    %v1796 = vlaneseq
    %v1797 = vshrl.u32 %v1796, 7
    %v1798 = vsub.s32 2, %v1797
    %v1799 = vrot.slane %v1786, %v1798
    %v1800 = vlaneseq
    %v1801 = vshrl.u32 %v1800, 7
    %v1802 = vsub.s32 3, %v1801
    %v1803 = vrot.slane %v1786, %v1802
    %v1936 = vunpack.c.l.b16 %v1658
    %v1937 = vunpack.c.h.b16 %v1658
    %v1938 = vunpack.c.l.b16 %v1659
    %v1939 = vunpack.c.h.b16 %v1659
    %v1940 = vunpack.c.l.b16 %v1660
    %v1941 = vunpack.c.h.b16 %v1660
    %v1942 = vunpack.c.l.b16 %v1661
    %v1943 = vunpack.c.h.b16 %v1661
    %v1944 = vunpack.c.l.b16 %v1662
    %v1945 = vunpack.c.h.b16 %v1662
    %v1946 = vunpack.c.l.b16 %v1663
    %v1947 = vunpack.c.h.b16 %v1663
    %v1948 = vunpack.c.l.b16 %v1664
    %v1949 = vunpack.c.h.b16 %v1664
    %v1950 = vunpack.c.l.b16 %v1665
    %v1951 = vunpack.c.h.b16 %v1665
    %v1952 = vunpack.c.l.b16 %v1666
    %v1953 = vunpack.c.h.b16 %v1666
    %v1954 = vunpack.c.l.b16 %v1667
    %v1955 = vunpack.c.h.b16 %v1667
    %v1956 = vunpack.c.l.b16 %v1668
    %v1957 = vunpack.c.h.b16 %v1668
    %v1958 = vunpack.c.l.b16 %v1669
    %v1959 = vunpack.c.h.b16 %v1669
    %v1960 = vunpack.c.l.b16 %v1670
    %v1961 = vunpack.c.h.b16 %v1670
    %v1962 = vunpack.c.l.b16 %v1671
    %v1963 = vunpack.c.h.b16 %v1671
    %v1964 = vunpack.c.l.b16 %v1672
    %v1965 = vunpack.c.h.b16 %v1672
    %v1966 = vunpack.c.l.b16 %v1673
    %v1967 = vunpack.c.h.b16 %v1673
    %v1968 = vunpack.c.l.b16 %v1674
    %v1969 = vunpack.c.h.b16 %v1674
    %v1970 = vunpack.c.l.b16 %v1675
    %v1971 = vunpack.c.h.b16 %v1675
    %v1972 = vunpack.c.l.b16 %v1676
    %v1973 = vunpack.c.h.b16 %v1676
    %v1974 = vunpack.c.l.b16 %v1677
    %v1975 = vunpack.c.h.b16 %v1677
    %v1976 = vunpack.c.l.b16 %v1678
    %v1977 = vunpack.c.h.b16 %v1678
    %v1978 = vunpack.c.l.b16 %v1679
    %v1979 = vunpack.c.h.b16 %v1679
    %v1980 = vunpack.c.l.b16 %v1680
    %v1981 = vunpack.c.h.b16 %v1680
    %v1982 = vunpack.c.l.b16 %v1681
    %v1983 = vunpack.c.h.b16 %v1681
    %v1984 = vunpack.c.l.b16 %v1682
    %v1985 = vunpack.c.h.b16 %v1682
    %v1986 = vunpack.c.l.b16 %v1683
    %v1987 = vunpack.c.h.b16 %v1683
    %v1988 = vunpack.c.l.b16 %v1684
    %v1989 = vunpack.c.h.b16 %v1684
    %v1990 = vunpack.c.l.b16 %v1685
    %v1991 = vunpack.c.h.b16 %v1685
    %v1992 = vunpack.c.l.b16 %v1686
    %v1993 = vunpack.c.h.b16 %v1686
    %v1994 = vunpack.c.l.b16 %v1687
    %v1995 = vunpack.c.h.b16 %v1687
    %v1996 = vunpack.c.l.b16 %v1688
    %v1997 = vunpack.c.h.b16 %v1688
    %v1998 = vunpack.c.l.b16 %v1689
    %v1999 = vunpack.c.h.b16 %v1689
    %v2000 = vunpack.c.l.b16 %v1690
    %v2001 = vunpack.c.h.b16 %v1690
    %v2002 = vunpack.c.l.b16 %v1691
    %v2003 = vunpack.c.h.b16 %v1691
    %v2004 = vunpack.c.l.b16 %v1692
    %v2005 = vunpack.c.h.b16 %v1692
    %v2006 = vunpack.c.l.b16 %v1693
    %v2007 = vunpack.c.h.b16 %v1693
    %v2008 = vunpack.c.l.b16 %v1694
    %v2009 = vunpack.c.h.b16 %v1694
    %v2010 = vunpack.c.l.b16 %v1695
    %v2011 = vunpack.c.h.b16 %v1695
    %v2012 = vunpack.c.l.b16 %v1696
    %v2013 = vunpack.c.h.b16 %v1696
    %v2014 = vunpack.c.l.b16 %v1697
    %v2015 = vunpack.c.h.b16 %v1697
    %v2016 = vunpack.c.l.b16 %v1698
    %v2017 = vunpack.c.h.b16 %v1698
    %v2018 = vunpack.c.l.b16 %v1699
    %v2019 = vunpack.c.h.b16 %v1699
    %v2020 = vunpack.c.l.b16 %v1700
    %v2021 = vunpack.c.h.b16 %v1700
    %v2022 = vunpack.c.l.b16 %v1701
    %v2023 = vunpack.c.h.b16 %v1701
    %v2024 = vunpack.c.l.b16 %v1702
    %v2025 = vunpack.c.h.b16 %v1702
    %v2026 = vunpack.c.l.b16 %v1703
    %v2027 = vunpack.c.h.b16 %v1703
    %v2028 = vunpack.c.l.b16 %v1704
    %v2029 = vunpack.c.h.b16 %v1704
    %v2030 = vunpack.c.l.b16 %v1705
    %v2031 = vunpack.c.h.b16 %v1705
    %v2032 = vunpack.c.l.b16 %v1706
    %v2033 = vunpack.c.h.b16 %v1706
    %v2034 = vunpack.c.l.b16 %v1707
    %v2035 = vunpack.c.h.b16 %v1707
    %v2036 = vunpack.c.l.b16 %v1708
    %v2037 = vunpack.c.h.b16 %v1708
    %v2038 = vunpack.c.l.b16 %v1709
    %v2039 = vunpack.c.h.b16 %v1709
    %v2040 = vunpack.c.l.b16 %v1710
    %v2041 = vunpack.c.h.b16 %v1710
    %v2042 = vunpack.c.l.b16 %v1711
    %v2043 = vunpack.c.h.b16 %v1711
    %v2044 = vunpack.c.l.b16 %v1712
    %v2045 = vunpack.c.h.b16 %v1712
    %v2046 = vunpack.c.l.b16 %v1713
    %v2047 = vunpack.c.h.b16 %v1713
    %v2048 = vunpack.c.l.b16 %v1714
    %v2049 = vunpack.c.h.b16 %v1714
    %v2050 = vunpack.c.l.b16 %v1715
    %v2051 = vunpack.c.h.b16 %v1715
    %v2052 = vunpack.c.l.b16 %v1716
    %v2053 = vunpack.c.h.b16 %v1716
    %v2054 = vunpack.c.l.b16 %v1717
    %v2055 = vunpack.c.h.b16 %v1717
    %v2056 = vunpack.c.l.b16 %v1718
    %v2057 = vunpack.c.h.b16 %v1718
    %v2058 = vunpack.c.l.b16 %v1719
    %v2059 = vunpack.c.h.b16 %v1719
    %v2060 = vunpack.c.l.b16 %v1720
    %v2061 = vunpack.c.h.b16 %v1720
    %v2062 = vunpack.c.l.b16 %v1721
    %v2063 = vunpack.c.h.b16 %v1721
    %v2064 = vunpack.c.l.b16 %v1722
    %v2065 = vunpack.c.h.b16 %v1722
    %v2066 = vunpack.c.l.b16 %v1723
    %v2067 = vunpack.c.h.b16 %v1723
    %v2068 = vunpack.c.l.b16 %v1724
    %v2069 = vunpack.c.h.b16 %v1724
    %v2070 = vunpack.c.l.b16 %v1725
    %v2071 = vunpack.c.h.b16 %v1725
    %v2072 = vunpack.c.l.b16 %v1726
    %v2073 = vunpack.c.h.b16 %v1726
    %v2074 = vunpack.c.l.b16 %v1727
    %v2075 = vunpack.c.h.b16 %v1727
    %v2076 = vunpack.c.l.b16 %v1728
    %v2077 = vunpack.c.h.b16 %v1728
    %v2078 = vunpack.c.l.b16 %v1729
    %v2079 = vunpack.c.h.b16 %v1729
    %v2080 = vunpack.c.l.b16 %v1730
    %v2081 = vunpack.c.h.b16 %v1730
    %v2082 = vunpack.c.l.b16 %v1731
    %v2083 = vunpack.c.h.b16 %v1731
    %v2084 = vunpack.c.l.b16 %v1732
    %v2085 = vunpack.c.h.b16 %v1732
    %v2086 = vunpack.c.l.b16 %v1733
    %v2087 = vunpack.c.h.b16 %v1733
    %v2088 = vunpack.c.l.b16 %v1734
    %v2089 = vunpack.c.h.b16 %v1734
    %v2090 = vunpack.c.l.b16 %v1735
    %v2091 = vunpack.c.h.b16 %v1735
    %v2092 = vunpack.c.l.b16 %v1736
    %v2093 = vunpack.c.h.b16 %v1736
    %v2094 = vunpack.c.l.b16 %v1737
    %v2095 = vunpack.c.h.b16 %v1737
    %v2096 = vunpack.c.l.b16 %v1738
    %v2097 = vunpack.c.h.b16 %v1738
    %v2098 = vunpack.c.l.b16 %v1739
    %v2099 = vunpack.c.h.b16 %v1739
    %v2100 = vunpack.c.l.b16 %v1740
    %v2101 = vunpack.c.h.b16 %v1740
    %v2102 = vunpack.c.l.b16 %v1741
    %v2103 = vunpack.c.h.b16 %v1741
    %v2104 = vunpack.c.l.b16 %v1742
    %v2105 = vunpack.c.h.b16 %v1742
    %v2106 = vunpack.c.l.b16 %v1743
    %v2107 = vunpack.c.h.b16 %v1743
    %v2108 = vunpack.c.l.b16 %v1744
    %v2109 = vunpack.c.h.b16 %v1744
    %v2110 = vunpack.c.l.b16 %v1745
    %v2111 = vunpack.c.h.b16 %v1745
    %v2112 = vunpack.c.l.b16 %v1746
    %v2113 = vunpack.c.h.b16 %v1746
    %v2114 = vunpack.c.l.b16 %v1747
    %v2115 = vunpack.c.h.b16 %v1747
    %v2116 = vunpack.c.l.b16 %v1748
    %v2117 = vunpack.c.h.b16 %v1748
    %v2118 = vunpack.c.l.b16 %v1749
    %v2119 = vunpack.c.h.b16 %v1749
    %v2120 = vunpack.c.l.b16 %v1750
    %v2121 = vunpack.c.h.b16 %v1750
    %v2122 = vunpack.c.l.b16 %v1751
    %v2123 = vunpack.c.h.b16 %v1751
    %v2124 = vunpack.c.l.b16 %v1752
    %v2125 = vunpack.c.h.b16 %v1752
    %v2126 = vunpack.c.l.b16 %v1753
    %v2127 = vunpack.c.h.b16 %v1753
    %v2128 = vunpack.c.l.b16 %v1754
    %v2129 = vunpack.c.h.b16 %v1754
    %v2130 = vunpack.c.l.b16 %v1755
    %v2131 = vunpack.c.h.b16 %v1755
    %v2132 = vunpack.c.l.b16 %v1756
    %v2133 = vunpack.c.h.b16 %v1756
    %v2134 = vunpack.c.l.b16 %v1757
    %v2135 = vunpack.c.h.b16 %v1757
    %v2136 = vunpack.c.l.b16 %v1758
    %v2137 = vunpack.c.h.b16 %v1758
    %v2138 = vunpack.c.l.b16 %v1759
    %v2139 = vunpack.c.h.b16 %v1759
    %v2140 = vunpack.c.l.b16 %v1760
    %v2141 = vunpack.c.h.b16 %v1760
    %v2142 = vunpack.c.l.b16 %v1761
    %v2143 = vunpack.c.h.b16 %v1761
    %v2144 = vunpack.c.l.b16 %v1762
    %v2145 = vunpack.c.h.b16 %v1762
    %v2146 = vunpack.c.l.b16 %v1763
    %v2147 = vunpack.c.h.b16 %v1763
    %v2148 = vunpack.c.l.b16 %v1764
    %v2149 = vunpack.c.h.b16 %v1764
    %v2150 = vunpack.c.l.b16 %v1765
    %v2151 = vunpack.c.h.b16 %v1765
    %v2152 = vunpack.c.l.b16 %v1766
    %v2153 = vunpack.c.h.b16 %v1766
    %v2154 = vunpack.c.l.b16 %v1767
    %v2155 = vunpack.c.h.b16 %v1767
    %v2156 = vunpack.c.l.b16 %v1768
    %v2157 = vunpack.c.h.b16 %v1768
    %v2158 = vunpack.c.l.b16 %v1769
    %v2159 = vunpack.c.h.b16 %v1769
    %v2160 = vunpack.c.l.b16 %v1770
    %v2161 = vunpack.c.h.b16 %v1770
    %v2162 = vunpack.c.l.b16 %v1771
    %v2163 = vunpack.c.h.b16 %v1771
    %v2164 = vunpack.c.l.b16 %v1772
    %v2165 = vunpack.c.h.b16 %v1772
    %v2166 = vunpack.c.l.b16 %v1773
    %v2167 = vunpack.c.h.b16 %v1773
    %v2168 = vunpack.c.l.b16 %v1774
    %v2169 = vunpack.c.h.b16 %v1774
    %v2170 = vunpack.c.l.b16 %v1775
    %v2171 = vunpack.c.h.b16 %v1775
    %v2172 = vunpack.c.l.b16 %v1776
    %v2173 = vunpack.c.h.b16 %v1776
    %v2174 = vunpack.c.l.b16 %v1777
    %v2175 = vunpack.c.h.b16 %v1777
    %v2176 = vunpack.c.l.b16 %v1778
    %v2177 = vunpack.c.h.b16 %v1778
    %v2178 = vunpack.c.l.b16 %v1779
    %v2179 = vunpack.c.h.b16 %v1779
    %v2180 = vunpack.c.l.b16 %v1780
    %v2181 = vunpack.c.h.b16 %v1780
    %v2182 = vunpack.c.l.b16 %v1781
    %v2183 = vunpack.c.h.b16 %v1781
    %v2184 = vunpack.c.l.b16 %v1782
    %v2185 = vunpack.c.h.b16 %v1782
    %v2186 = vunpack.c.l.b16 %v1783
    %v2187 = vunpack.c.h.b16 %v1783
    %v2188 = vunpack.c.l.b16 %v1784
    %v2189 = vunpack.c.h.b16 %v1784
    %v2190 = vunpack.c.l.b16 %v1785
    %v2191 = vunpack.c.h.b16 %v1785
    %v2192 = vpack.c.b16 %v1940, %v1936
    %v2193 = vpack.c.b16 %v1941, %v1937
    %v2194 = vpack.c.b16 %v1942, %v1938
    %v2195 = vpack.c.b16 %v1943, %v1939
    %v2196 = vpack.c.b16 %v1948, %v1944
    %v2197 = vpack.c.b16 %v1949, %v1945
    %v2198 = vpack.c.b16 %v1950, %v1946
    %v2199 = vpack.c.b16 %v1951, %v1947
    %v2200 = vpack.c.b16 %v1956, %v1952
    %v2201 = vpack.c.b16 %v1957, %v1953
    %v2202 = vpack.c.b16 %v1958, %v1954
    %v2203 = vpack.c.b16 %v1959, %v1955
    %v2204 = vpack.c.b16 %v1964, %v1960
    %v2205 = vpack.c.b16 %v1965, %v1961
    %v2206 = vpack.c.b16 %v1966, %v1962
    %v2207 = vpack.c.b16 %v1967, %v1963
    %v2208 = vpack.c.b16 %v1972, %v1968
    %v2209 = vpack.c.b16 %v1973, %v1969
    %v2210 = vpack.c.b16 %v1974, %v1970
    %v2211 = vpack.c.b16 %v1975, %v1971
    %v2212 = vpack.c.b16 %v1980, %v1976
    %v2213 = vpack.c.b16 %v1981, %v1977
    %v2214 = vpack.c.b16 %v1982, %v1978
    %v2215 = vpack.c.b16 %v1983, %v1979
    %v2216 = vpack.c.b16 %v1988, %v1984
    %v2217 = vpack.c.b16 %v1989, %v1985
    %v2218 = vpack.c.b16 %v1990, %v1986
    %v2219 = vpack.c.b16 %v1991, %v1987
    %v2220 = vpack.c.b16 %v1996, %v1992
    %v2221 = vpack.c.b16 %v1997, %v1993
    %v2222 = vpack.c.b16 %v1998, %v1994
    %v2223 = vpack.c.b16 %v1999, %v1995
    %v2224 = vpack.c.b16 %v2004, %v2000
    %v2225 = vpack.c.b16 %v2005, %v2001
    %v2226 = vpack.c.b16 %v2006, %v2002
    %v2227 = vpack.c.b16 %v2007, %v2003
    %v2228 = vpack.c.b16 %v2012, %v2008
    %v2229 = vpack.c.b16 %v2013, %v2009
    %v2230 = vpack.c.b16 %v2014, %v2010
    %v2231 = vpack.c.b16 %v2015, %v2011
    %v2232 = vpack.c.b16 %v2020, %v2016
    %v2233 = vpack.c.b16 %v2021, %v2017
    %v2234 = vpack.c.b16 %v2022, %v2018
    %v2235 = vpack.c.b16 %v2023, %v2019
    %v2236 = vpack.c.b16 %v2028, %v2024
    %v2237 = vpack.c.b16 %v2029, %v2025
    %v2238 = vpack.c.b16 %v2030, %v2026
    %v2239 = vpack.c.b16 %v2031, %v2027
    %v2240 = vpack.c.b16 %v2036, %v2032
    %v2241 = vpack.c.b16 %v2037, %v2033
    %v2242 = vpack.c.b16 %v2038, %v2034
    %v2243 = vpack.c.b16 %v2039, %v2035
    %v2244 = vpack.c.b16 %v2044, %v2040
    %v2245 = vpack.c.b16 %v2045, %v2041
    %v2246 = vpack.c.b16 %v2046, %v2042
    %v2247 = vpack.c.b16 %v2047, %v2043
    %v2248 = vpack.c.b16 %v2052, %v2048
    %v2249 = vpack.c.b16 %v2053, %v2049
    %v2250 = vpack.c.b16 %v2054, %v2050
    %v2251 = vpack.c.b16 %v2055, %v2051
    %v2252 = vpack.c.b16 %v2060, %v2056
    %v2253 = vpack.c.b16 %v2061, %v2057
    %v2254 = vpack.c.b16 %v2062, %v2058
    %v2255 = vpack.c.b16 %v2063, %v2059
    %v2256 = vpack.c.b16 %v2068, %v2064
    %v2257 = vpack.c.b16 %v2069, %v2065
    %v2258 = vpack.c.b16 %v2070, %v2066
    %v2259 = vpack.c.b16 %v2071, %v2067
    %v2260 = vpack.c.b16 %v2076, %v2072
    %v2261 = vpack.c.b16 %v2077, %v2073
    %v2262 = vpack.c.b16 %v2078, %v2074
    %v2263 = vpack.c.b16 %v2079, %v2075
    %v2264 = vpack.c.b16 %v2084, %v2080
    %v2265 = vpack.c.b16 %v2085, %v2081
    %v2266 = vpack.c.b16 %v2086, %v2082
    %v2267 = vpack.c.b16 %v2087, %v2083
    %v2268 = vpack.c.b16 %v2092, %v2088
    %v2269 = vpack.c.b16 %v2093, %v2089
    %v2270 = vpack.c.b16 %v2094, %v2090
    %v2271 = vpack.c.b16 %v2095, %v2091
    %v2272 = vpack.c.b16 %v2100, %v2096
    %v2273 = vpack.c.b16 %v2101, %v2097
    %v2274 = vpack.c.b16 %v2102, %v2098
    %v2275 = vpack.c.b16 %v2103, %v2099
    %v2276 = vpack.c.b16 %v2108, %v2104
    %v2277 = vpack.c.b16 %v2109, %v2105
    %v2278 = vpack.c.b16 %v2110, %v2106
    %v2279 = vpack.c.b16 %v2111, %v2107
    %v2280 = vpack.c.b16 %v2116, %v2112
    %v2281 = vpack.c.b16 %v2117, %v2113
    %v2282 = vpack.c.b16 %v2118, %v2114
    %v2283 = vpack.c.b16 %v2119, %v2115
    %v2284 = vpack.c.b16 %v2124, %v2120
    %v2285 = vpack.c.b16 %v2125, %v2121
    %v2286 = vpack.c.b16 %v2126, %v2122
    %v2287 = vpack.c.b16 %v2127, %v2123
    %v2288 = vpack.c.b16 %v2132, %v2128
    %v2289 = vpack.c.b16 %v2133, %v2129
    %v2290 = vpack.c.b16 %v2134, %v2130
    %v2291 = vpack.c.b16 %v2135, %v2131
    %v2292 = vpack.c.b16 %v2140, %v2136
    %v2293 = vpack.c.b16 %v2141, %v2137
    %v2294 = vpack.c.b16 %v2142, %v2138
    %v2295 = vpack.c.b16 %v2143, %v2139
    %v2296 = vpack.c.b16 %v2148, %v2144
    %v2297 = vpack.c.b16 %v2149, %v2145
    %v2298 = vpack.c.b16 %v2150, %v2146
    %v2299 = vpack.c.b16 %v2151, %v2147
    %v2300 = vpack.c.b16 %v2156, %v2152
    %v2301 = vpack.c.b16 %v2157, %v2153
    %v2302 = vpack.c.b16 %v2158, %v2154
    %v2303 = vpack.c.b16 %v2159, %v2155
    %v2304 = vpack.c.b16 %v2164, %v2160
    %v2305 = vpack.c.b16 %v2165, %v2161
    %v2306 = vpack.c.b16 %v2166, %v2162
    %v2307 = vpack.c.b16 %v2167, %v2163
    %v2308 = vpack.c.b16 %v2172, %v2168
    %v2309 = vpack.c.b16 %v2173, %v2169
    %v2310 = vpack.c.b16 %v2174, %v2170
    %v2311 = vpack.c.b16 %v2175, %v2171
    %v2312 = vpack.c.b16 %v2180, %v2176
    %v2313 = vpack.c.b16 %v2181, %v2177
    %v2314 = vpack.c.b16 %v2182, %v2178
    %v2315 = vpack.c.b16 %v2183, %v2179
    %v2316 = vpack.c.b16 %v2188, %v2184
    %v2317 = vpack.c.b16 %v2189, %v2185
    %v2318 = vpack.c.b16 %v2190, %v2186
    %v2319 = vpack.c.b16 %v2191, %v2187
    %2448 = vmatprep.subr.bf16.mxu0 %v2221
    %2449 = vmatpush1.bf16.msra.mxu0 %v2220
    %2450 = vmatprep.subr.bf16.mxu0 %v2217
    %2451 = vmatpush1.bf16.msra.mxu0 %v2216
    %2452 = vmatprep.subr.bf16.mxu0 %v2213
    %2453 = vmatpush1.bf16.msra.mxu0 %v2212
    %2454 = vmatprep.subr.bf16.mxu0 %v2209
    %2455 = vmatpush1.bf16.msra.mxu0 %v2208
    %2456 = vmatprep.subr.bf16.mxu0 %v2205
    %2457 = vmatpush1.bf16.msra.mxu0 %v2204
    %2458 = vmatprep.subr.bf16.mxu0 %v2201
    %2459 = vmatpush1.bf16.msra.mxu0 %v2200
    %2460 = vmatprep.subr.bf16.mxu0 %v2197
    %2461 = vmatpush1.bf16.msra.mxu0 %v2196
    %2462 = vmatprep.subr.bf16.mxu0 %v2193
    %2463 = vmatpush1.bf16.msra.mxu0 %v2192
    %2464 = vmatprep.subr.bf16.mxu0 %v2253
    %2465 = vmatpush2.bf16.msra.mxu0 %v2252
    %2466 = vmatprep.subr.bf16.mxu0 %v2249
    %2467 = vmatpush2.bf16.msra.mxu0 %v2248
    %2468 = vmatprep.subr.bf16.mxu0 %v2245
    %2469 = vmatpush2.bf16.msra.mxu0 %v2244
    %2470 = vmatprep.subr.bf16.mxu0 %v2241
    %2471 = vmatpush2.bf16.msra.mxu0 %v2240
    %2472 = vmatprep.subr.bf16.mxu0 %v2237
    %2473 = vmatpush2.bf16.msra.mxu0 %v2236
    %2474 = vmatprep.subr.bf16.mxu0 %v2233
    %2475 = vmatpush2.bf16.msra.mxu0 %v2232
    %2476 = vmatprep.subr.bf16.mxu0 %v2229
    %2477 = vmatpush2.bf16.msra.mxu0 %v2228
    %2478 = vmatprep.subr.bf16.mxu0 %v2225
    %2479 = vmatpush2.bf16.msra.mxu0 %v2224
    %2480 = vmatprep.mubr.bf16.mxu0 %v1655
    %2481 = vmatmul.mubr.bf16.gmra.mxu0 %v1654
    %v2482 = vpop.f32.mrf.mxu0
    %v2483 = vadd.f32 %v1791, %v2482
    %v2484 = vpop.f32.mrf.mxu0
    %v2485 = vadd.f32 %v1795, %v2484
    %v2486 = vpop.f32.mrf.mxu0
    %v2487 = vpop.f32.mrf.mxu0
    %2488 = vdwg.mxu0
    %2489 = vmatprep.subr.bf16.mxu0 %v2285
    %2490 = vmatpush1.bf16.msra.mxu0 %v2284
    %2491 = vmatprep.subr.bf16.mxu0 %v2281
    %2492 = vmatpush1.bf16.msra.mxu0 %v2280
    %2493 = vmatprep.subr.bf16.mxu0 %v2277
    %2494 = vmatpush1.bf16.msra.mxu0 %v2276
    %2495 = vmatprep.subr.bf16.mxu0 %v2273
    %2496 = vmatpush1.bf16.msra.mxu0 %v2272
    %2497 = vmatprep.subr.bf16.mxu0 %v2269
    %2498 = vmatpush1.bf16.msra.mxu0 %v2268
    %2499 = vmatprep.subr.bf16.mxu0 %v2265
    %2500 = vmatpush1.bf16.msra.mxu0 %v2264
    %2501 = vmatprep.subr.bf16.mxu0 %v2261
    %2502 = vmatpush1.bf16.msra.mxu0 %v2260
    %2503 = vmatprep.subr.bf16.mxu0 %v2257
    %2504 = vmatpush1.bf16.msra.mxu0 %v2256
    %2505 = vmatprep.subr.bf16.mxu0 %v2317
    %2506 = vmatpush2.bf16.msra.mxu0 %v2316
    %2507 = vmatprep.subr.bf16.mxu0 %v2313
    %2508 = vmatpush2.bf16.msra.mxu0 %v2312
    %2509 = vmatprep.subr.bf16.mxu0 %v2309
    %2510 = vmatpush2.bf16.msra.mxu0 %v2308
    %2511 = vmatprep.subr.bf16.mxu0 %v2305
    %2512 = vmatpush2.bf16.msra.mxu0 %v2304
    %2513 = vmatprep.subr.bf16.mxu0 %v2301
    %2514 = vmatpush2.bf16.msra.mxu0 %v2300
    %2515 = vmatprep.subr.bf16.mxu0 %v2297
    %2516 = vmatpush2.bf16.msra.mxu0 %v2296
    %2517 = vmatprep.subr.bf16.mxu0 %v2293
    %2518 = vmatpush2.bf16.msra.mxu0 %v2292
    %2519 = vmatprep.subr.bf16.mxu0 %v2289
    %2520 = vmatpush2.bf16.msra.mxu0 %v2288
    %2521 = vmatprep.mubr.bf16.mxu0 %v1657
    %2522 = vmatmul.mubr.bf16.gmra.mxu0 %v1656
    %v2523 = vpop.f32.mrf.mxu0
    %v2524 = vadd.f32 %v2483, %v2523
    %v2525 = vpop.f32.mrf.mxu0
    %v2526 = vadd.f32 %v2485, %v2525
    %v2527 = vpop.f32.mrf.mxu0
    %v2528 = vpop.f32.mrf.mxu0
    %2529 = vdwg.mxu0
    %2530 = vmatprep.subr.bf16.mxu0 %v2223
    %2531 = vmatpush1.bf16.msra.mxu0 %v2222
    %2532 = vmatprep.subr.bf16.mxu0 %v2219
    %2533 = vmatpush1.bf16.msra.mxu0 %v2218
    %2534 = vmatprep.subr.bf16.mxu0 %v2215
    %2535 = vmatpush1.bf16.msra.mxu0 %v2214
    %2536 = vmatprep.subr.bf16.mxu0 %v2211
    %2537 = vmatpush1.bf16.msra.mxu0 %v2210
    %2538 = vmatprep.subr.bf16.mxu0 %v2207
    %2539 = vmatpush1.bf16.msra.mxu0 %v2206
    %2540 = vmatprep.subr.bf16.mxu0 %v2203
    %2541 = vmatpush1.bf16.msra.mxu0 %v2202
    %2542 = vmatprep.subr.bf16.mxu0 %v2199
    %2543 = vmatpush1.bf16.msra.mxu0 %v2198
    %2544 = vmatprep.subr.bf16.mxu0 %v2195
    %2545 = vmatpush1.bf16.msra.mxu0 %v2194
    %2546 = vmatprep.subr.bf16.mxu0 %v2255
    %2547 = vmatpush2.bf16.msra.mxu0 %v2254
    %2548 = vmatprep.subr.bf16.mxu0 %v2251
    %2549 = vmatpush2.bf16.msra.mxu0 %v2250
    %2550 = vmatprep.subr.bf16.mxu0 %v2247
    %2551 = vmatpush2.bf16.msra.mxu0 %v2246
    %2552 = vmatprep.subr.bf16.mxu0 %v2243
    %2553 = vmatpush2.bf16.msra.mxu0 %v2242
    %2554 = vmatprep.subr.bf16.mxu0 %v2239
    %2555 = vmatpush2.bf16.msra.mxu0 %v2238
    %2556 = vmatprep.subr.bf16.mxu0 %v2235
    %2557 = vmatpush2.bf16.msra.mxu0 %v2234
    %2558 = vmatprep.subr.bf16.mxu0 %v2231
    %2559 = vmatpush2.bf16.msra.mxu0 %v2230
    %2560 = vmatprep.subr.bf16.mxu0 %v2227
    %2561 = vmatpush2.bf16.msra.mxu0 %v2226
    %2562 = vmatprep.mubr.bf16.mxu0 %v1655
    %2563 = vmatmul.mubr.bf16.gmra.mxu0 %v1654
    %v2564 = vpop.f32.mrf.mxu0
    %v2565 = vadd.f32 %v1799, %v2564
    %v2566 = vpop.f32.mrf.mxu0
    %v2567 = vadd.f32 %v1803, %v2566
    %v2568 = vpop.f32.mrf.mxu0
    %v2569 = vpop.f32.mrf.mxu0
    %2570 = vdwg.mxu0
    %2571 = vmatprep.subr.bf16.mxu0 %v2287
    %2572 = vmatpush1.bf16.msra.mxu0 %v2286
    %2573 = vmatprep.subr.bf16.mxu0 %v2283
    %2574 = vmatpush1.bf16.msra.mxu0 %v2282
    %2575 = vmatprep.subr.bf16.mxu0 %v2279
    %2576 = vmatpush1.bf16.msra.mxu0 %v2278
    %2577 = vmatprep.subr.bf16.mxu0 %v2275
    %2578 = vmatpush1.bf16.msra.mxu0 %v2274
    %2579 = vmatprep.subr.bf16.mxu0 %v2271
    %2580 = vmatpush1.bf16.msra.mxu0 %v2270
    %2581 = vmatprep.subr.bf16.mxu0 %v2267
    %2582 = vmatpush1.bf16.msra.mxu0 %v2266
    %2583 = vmatprep.subr.bf16.mxu0 %v2263
    %2584 = vmatpush1.bf16.msra.mxu0 %v2262
    %2585 = vmatprep.subr.bf16.mxu0 %v2259
    %2586 = vmatpush1.bf16.msra.mxu0 %v2258
    %2587 = vmatprep.subr.bf16.mxu0 %v2319
    %2588 = vmatpush2.bf16.msra.mxu0 %v2318
    %2589 = vmatprep.subr.bf16.mxu0 %v2315
    %2590 = vmatpush2.bf16.msra.mxu0 %v2314
    %2591 = vmatprep.subr.bf16.mxu0 %v2311
    %2592 = vmatpush2.bf16.msra.mxu0 %v2310
    %2593 = vmatprep.subr.bf16.mxu0 %v2307
    %2594 = vmatpush2.bf16.msra.mxu0 %v2306
    %2595 = vmatprep.subr.bf16.mxu0 %v2303
    %2596 = vmatpush2.bf16.msra.mxu0 %v2302
    %2597 = vmatprep.subr.bf16.mxu0 %v2299
    %2598 = vmatpush2.bf16.msra.mxu0 %v2298
    %2599 = vmatprep.subr.bf16.mxu0 %v2295
    %2600 = vmatpush2.bf16.msra.mxu0 %v2294
    %2601 = vmatprep.subr.bf16.mxu0 %v2291
    %2602 = vmatpush2.bf16.msra.mxu0 %v2290
    %2603 = vmatprep.mubr.bf16.mxu0 %v1657
    %2604 = vmatmul.mubr.bf16.gmra.mxu0 %v1656
    %v2605 = vpop.f32.mrf.mxu0
    %v2606 = vadd.f32 %v2565, %v2605
    %v2607 = vpop.f32.mrf.mxu0
    %v2608 = vadd.f32 %v2567, %v2607
    %v2609 = vpop.f32.mrf.mxu0
    %v2610 = vpop.f32.mrf.mxu0
    %2611 = vdwg.mxu0
    %v2612 = vmax.f32 %v2524, 0.0
    %v2613 = vmax.f32 %v2526, 0.0
    %v2614 = vmax.f32 %v2606, 0.0
    %v2615 = vmax.f32 %v2608, 0.0
    %v2616 = vpack.c.bf16 %v2612, %v2612
    %v2617 = vpack.c.bf16 %v2613, %v2613
    %v2618 = vpack.c.bf16 %v2614, %v2614
    %v2619 = vpack.c.bf16 %v2615, %v2615
    %v2620 = vld [vmem:[#allocation10] sm:$0xf]
    %v2621 = vld [vmem:[#allocation10 + $0x4] sm:$0xf]
    %v2622 = vld [vmem:[#allocation10 + $0x8] sm:$0xf]
    %v2623 = vld [vmem:[#allocation10 + $0xc] sm:$0xf]
    %v2624 = vld [vmem:[#allocation10 + $0x10] sm:$0xf]
    %v2625 = vld [vmem:[#allocation10 + $0x14] sm:$0xf]
    %v2626 = vld [vmem:[#allocation10 + $0x18] sm:$0xf]
    %v2627 = vld [vmem:[#allocation10 + $0x1c] sm:$0xf]
    %v2628 = vld [vmem:[#allocation10 + $0x20] sm:$0xf]
    %v2629 = vld [vmem:[#allocation10 + $0x24] sm:$0xf]
    %v2630 = vld [vmem:[#allocation10 + $0x28] sm:$0xf]
    %v2631 = vld [vmem:[#allocation10 + $0x2c] sm:$0xf]
    %v2632 = vld [vmem:[#allocation10 + $0x30] sm:$0xf]
    %v2633 = vld [vmem:[#allocation10 + $0x34] sm:$0xf]
    %v2634 = vld [vmem:[#allocation10 + $0x38] sm:$0xf]
    %v2635 = vld [vmem:[#allocation10 + $0x3c] sm:$0xf]
    %v2636 = vld [vmem:[#allocation10 + $0x40] sm:$0xf]
    %v2637 = vld [vmem:[#allocation10 + $0x44] sm:$0xf]
    %v2638 = vld [vmem:[#allocation10 + $0x48] sm:$0xf]
    %v2639 = vld [vmem:[#allocation10 + $0x4c] sm:$0xf]
    %v2640 = vld [vmem:[#allocation10 + $0x50] sm:$0xf]
    %v2641 = vld [vmem:[#allocation10 + $0x54] sm:$0xf]
    %v2642 = vld [vmem:[#allocation10 + $0x58] sm:$0xf]
    %v2643 = vld [vmem:[#allocation10 + $0x5c] sm:$0xf]
    %v2644 = vld [vmem:[#allocation10 + $0x60] sm:$0xf]
    %v2645 = vld [vmem:[#allocation10 + $0x64] sm:$0xf]
    %v2646 = vld [vmem:[#allocation10 + $0x68] sm:$0xf]
    %v2647 = vld [vmem:[#allocation10 + $0x6c] sm:$0xf]
    %v2648 = vld [vmem:[#allocation10 + $0x70] sm:$0xf]
    %v2649 = vld [vmem:[#allocation10 + $0x74] sm:$0xf]
    %v2650 = vld [vmem:[#allocation10 + $0x78] sm:$0xf]
    %v2651 = vld [vmem:[#allocation10 + $0x7c] sm:$0xf]
    %v2652 = vld [vmem:[#allocation10 + $0x80] sm:$0xf]
    %v2653 = vld [vmem:[#allocation10 + $0x84] sm:$0xf]
    %v2654 = vld [vmem:[#allocation10 + $0x88] sm:$0xf]
    %v2655 = vld [vmem:[#allocation10 + $0x8c] sm:$0xf]
    %v2656 = vld [vmem:[#allocation10 + $0x90] sm:$0xf]
    %v2657 = vld [vmem:[#allocation10 + $0x94] sm:$0xf]
    %v2658 = vld [vmem:[#allocation10 + $0x98] sm:$0xf]
    %v2659 = vld [vmem:[#allocation10 + $0x9c] sm:$0xf]
    %v2660 = vld [vmem:[#allocation10 + $0xa0] sm:$0xf]
    %v2661 = vld [vmem:[#allocation10 + $0xa4] sm:$0xf]
    %v2662 = vld [vmem:[#allocation10 + $0xa8] sm:$0xf]
    %v2663 = vld [vmem:[#allocation10 + $0xac] sm:$0xf]
    %v2664 = vld [vmem:[#allocation10 + $0xb0] sm:$0xf]
    %v2665 = vld [vmem:[#allocation10 + $0xb4] sm:$0xf]
    %v2666 = vld [vmem:[#allocation10 + $0xb8] sm:$0xf]
    %v2667 = vld [vmem:[#allocation10 + $0xbc] sm:$0xf]
    %v2668 = vld [vmem:[#allocation10 + $0xc0] sm:$0xf]
    %v2669 = vld [vmem:[#allocation10 + $0xc4] sm:$0xf]
    %v2670 = vld [vmem:[#allocation10 + $0xc8] sm:$0xf]
    %v2671 = vld [vmem:[#allocation10 + $0xcc] sm:$0xf]
    %v2672 = vld [vmem:[#allocation10 + $0xd0] sm:$0xf]
    %v2673 = vld [vmem:[#allocation10 + $0xd4] sm:$0xf]
    %v2674 = vld [vmem:[#allocation10 + $0xd8] sm:$0xf]
    %v2675 = vld [vmem:[#allocation10 + $0xdc] sm:$0xf]
    %v2676 = vld [vmem:[#allocation10 + $0xe0] sm:$0xf]
    %v2677 = vld [vmem:[#allocation10 + $0xe4] sm:$0xf]
    %v2678 = vld [vmem:[#allocation10 + $0xe8] sm:$0xf]
    %v2679 = vld [vmem:[#allocation10 + $0xec] sm:$0xf]
    %v2680 = vld [vmem:[#allocation10 + $0xf0] sm:$0xf]
    %v2681 = vld [vmem:[#allocation10 + $0xf4] sm:$0xf]
    %v2682 = vld [vmem:[#allocation10 + $0xf8] sm:$0xf]
    %v2683 = vld [vmem:[#allocation10 + $0xfc] sm:$0xf]
    %v2684 = vld [vmem:[%s6] sm:$0x1]
    %v2686 = vlaneseq
    %v2687 = vshrl.u32 %v2686, 7
    %v2688 = vsub.s32 0, %v2687
    %v2689 = vrot.slane %v2684, %v2688
    %v2755 = vunpack.c.l.b16 %v2620
    %v2756 = vunpack.c.l.b16 %v2621
    %v2757 = vunpack.c.l.b16 %v2622
    %v2758 = vunpack.c.l.b16 %v2623
    %v2759 = vunpack.c.l.b16 %v2624
    %v2760 = vunpack.c.l.b16 %v2625
    %v2761 = vunpack.c.l.b16 %v2626
    %v2762 = vunpack.c.l.b16 %v2627
    %v2763 = vunpack.c.l.b16 %v2628
    %v2764 = vunpack.c.l.b16 %v2629
    %v2765 = vunpack.c.l.b16 %v2630
    %v2766 = vunpack.c.l.b16 %v2631
    %v2767 = vunpack.c.l.b16 %v2632
    %v2768 = vunpack.c.l.b16 %v2633
    %v2769 = vunpack.c.l.b16 %v2634
    %v2770 = vunpack.c.l.b16 %v2635
    %v2771 = vunpack.c.l.b16 %v2636
    %v2772 = vunpack.c.l.b16 %v2637
    %v2773 = vunpack.c.l.b16 %v2638
    %v2774 = vunpack.c.l.b16 %v2639
    %v2775 = vunpack.c.l.b16 %v2640
    %v2776 = vunpack.c.l.b16 %v2641
    %v2777 = vunpack.c.l.b16 %v2642
    %v2778 = vunpack.c.l.b16 %v2643
    %v2779 = vunpack.c.l.b16 %v2644
    %v2780 = vunpack.c.l.b16 %v2645
    %v2781 = vunpack.c.l.b16 %v2646
    %v2782 = vunpack.c.l.b16 %v2647
    %v2783 = vunpack.c.l.b16 %v2648
    %v2784 = vunpack.c.l.b16 %v2649
    %v2785 = vunpack.c.l.b16 %v2650
    %v2786 = vunpack.c.l.b16 %v2651
    %v2787 = vunpack.c.l.b16 %v2652
    %v2788 = vunpack.c.l.b16 %v2653
    %v2789 = vunpack.c.l.b16 %v2654
    %v2790 = vunpack.c.l.b16 %v2655
    %v2791 = vunpack.c.l.b16 %v2656
    %v2792 = vunpack.c.l.b16 %v2657
    %v2793 = vunpack.c.l.b16 %v2658
    %v2794 = vunpack.c.l.b16 %v2659
    %v2795 = vunpack.c.l.b16 %v2660
    %v2796 = vunpack.c.l.b16 %v2661
    %v2797 = vunpack.c.l.b16 %v2662
    %v2798 = vunpack.c.l.b16 %v2663
    %v2799 = vunpack.c.l.b16 %v2664
    %v2800 = vunpack.c.l.b16 %v2665
    %v2801 = vunpack.c.l.b16 %v2666
    %v2802 = vunpack.c.l.b16 %v2667
    %v2803 = vunpack.c.l.b16 %v2668
    %v2804 = vunpack.c.l.b16 %v2669
    %v2805 = vunpack.c.l.b16 %v2670
    %v2806 = vunpack.c.l.b16 %v2671
    %v2807 = vunpack.c.l.b16 %v2672
    %v2808 = vunpack.c.l.b16 %v2673
    %v2809 = vunpack.c.l.b16 %v2674
    %v2810 = vunpack.c.l.b16 %v2675
    %v2811 = vunpack.c.l.b16 %v2676
    %v2812 = vunpack.c.l.b16 %v2677
    %v2813 = vunpack.c.l.b16 %v2678
    %v2814 = vunpack.c.l.b16 %v2679
    %v2815 = vunpack.c.l.b16 %v2680
    %v2816 = vunpack.c.l.b16 %v2681
    %v2817 = vunpack.c.l.b16 %v2682
    %v2818 = vunpack.c.l.b16 %v2683
    %v2819 = vpack.c.b16 %v2756, %v2755
    %v2820 = vpack.c.b16 %v2758, %v2757
    %v2821 = vpack.c.b16 %v2760, %v2759
    %v2822 = vpack.c.b16 %v2762, %v2761
    %v2823 = vpack.c.b16 %v2764, %v2763
    %v2824 = vpack.c.b16 %v2766, %v2765
    %v2825 = vpack.c.b16 %v2768, %v2767
    %v2826 = vpack.c.b16 %v2770, %v2769
    %v2827 = vpack.c.b16 %v2772, %v2771
    %v2828 = vpack.c.b16 %v2774, %v2773
    %v2829 = vpack.c.b16 %v2776, %v2775
    %v2830 = vpack.c.b16 %v2778, %v2777
    %v2831 = vpack.c.b16 %v2780, %v2779
    %v2832 = vpack.c.b16 %v2782, %v2781
    %v2833 = vpack.c.b16 %v2784, %v2783
    %v2834 = vpack.c.b16 %v2786, %v2785
    %v2835 = vpack.c.b16 %v2788, %v2787
    %v2836 = vpack.c.b16 %v2790, %v2789
    %v2837 = vpack.c.b16 %v2792, %v2791
    %v2838 = vpack.c.b16 %v2794, %v2793
    %v2839 = vpack.c.b16 %v2796, %v2795
    %v2840 = vpack.c.b16 %v2798, %v2797
    %v2841 = vpack.c.b16 %v2800, %v2799
    %v2842 = vpack.c.b16 %v2802, %v2801
    %v2843 = vpack.c.b16 %v2804, %v2803
    %v2844 = vpack.c.b16 %v2806, %v2805
    %v2845 = vpack.c.b16 %v2808, %v2807
    %v2846 = vpack.c.b16 %v2810, %v2809
    %v2847 = vpack.c.b16 %v2812, %v2811
    %v2848 = vpack.c.b16 %v2814, %v2813
    %v2849 = vpack.c.b16 %v2816, %v2815
    %v2850 = vpack.c.b16 %v2818, %v2817
    %2883 = vmatprep.subr.bf16.mxu0 0
    %2884 = vmatpush1.bf16.msra.mxu0 %v2826
    %2885 = vmatprep.subr.bf16.mxu0 0
    %2886 = vmatpush1.bf16.msra.mxu0 %v2825
    %2887 = vmatprep.subr.bf16.mxu0 0
    %2888 = vmatpush1.bf16.msra.mxu0 %v2824
    %2889 = vmatprep.subr.bf16.mxu0 0
    %2890 = vmatpush1.bf16.msra.mxu0 %v2823
    %2891 = vmatprep.subr.bf16.mxu0 0
    %2892 = vmatpush1.bf16.msra.mxu0 %v2822
    %2893 = vmatprep.subr.bf16.mxu0 0
    %2894 = vmatpush1.bf16.msra.mxu0 %v2821
    %2895 = vmatprep.subr.bf16.mxu0 0
    %2896 = vmatpush1.bf16.msra.mxu0 %v2820
    %2897 = vmatprep.subr.bf16.mxu0 0
    %2898 = vmatpush1.bf16.msra.mxu0 %v2819
    %2899 = vmatprep.subr.bf16.mxu0 0
    %2900 = vmatpush2.bf16.msra.mxu0 %v2834
    %2901 = vmatprep.subr.bf16.mxu0 0
    %2902 = vmatpush2.bf16.msra.mxu0 %v2833
    %2903 = vmatprep.subr.bf16.mxu0 0
    %2904 = vmatpush2.bf16.msra.mxu0 %v2832
    %2905 = vmatprep.subr.bf16.mxu0 0
    %2906 = vmatpush2.bf16.msra.mxu0 %v2831
    %2907 = vmatprep.subr.bf16.mxu0 0
    %2908 = vmatpush2.bf16.msra.mxu0 %v2830
    %2909 = vmatprep.subr.bf16.mxu0 0
    %2910 = vmatpush2.bf16.msra.mxu0 %v2829
    %2911 = vmatprep.subr.bf16.mxu0 0
    %2912 = vmatpush2.bf16.msra.mxu0 %v2828
    %2913 = vmatprep.subr.bf16.mxu0 0
    %2914 = vmatpush2.bf16.msra.mxu0 %v2827
    %2915 = vmatprep.mubr.bf16.mxu0 %v2617
    %2916 = vmatmul.mubr.bf16.gmra.mxu0 %v2616
    %v2917 = vpop.f32.mrf.mxu0
    %v2918 = vadd.f32 %v2689, %v2917
    %v2919 = vpop.f32.mrf.mxu0
    %v2920 = vpop.f32.mrf.mxu0
    %v2921 = vpop.f32.mrf.mxu0
    %2922 = vdwg.mxu0
    %2923 = vmatprep.subr.bf16.mxu0 0
    %2924 = vmatpush1.bf16.msra.mxu0 %v2842
    %2925 = vmatprep.subr.bf16.mxu0 0
    %2926 = vmatpush1.bf16.msra.mxu0 %v2841
    %2927 = vmatprep.subr.bf16.mxu0 0
    %2928 = vmatpush1.bf16.msra.mxu0 %v2840
    %2929 = vmatprep.subr.bf16.mxu0 0
    %2930 = vmatpush1.bf16.msra.mxu0 %v2839
    %2931 = vmatprep.subr.bf16.mxu0 0
    %2932 = vmatpush1.bf16.msra.mxu0 %v2838
    %2933 = vmatprep.subr.bf16.mxu0 0
    %2934 = vmatpush1.bf16.msra.mxu0 %v2837
    %2935 = vmatprep.subr.bf16.mxu0 0
    %2936 = vmatpush1.bf16.msra.mxu0 %v2836
    %2937 = vmatprep.subr.bf16.mxu0 0
    %2938 = vmatpush1.bf16.msra.mxu0 %v2835
    %2939 = vmatprep.subr.bf16.mxu0 0
    %2940 = vmatpush2.bf16.msra.mxu0 %v2850
    %2941 = vmatprep.subr.bf16.mxu0 0
    %2942 = vmatpush2.bf16.msra.mxu0 %v2849
    %2943 = vmatprep.subr.bf16.mxu0 0
    %2944 = vmatpush2.bf16.msra.mxu0 %v2848
    %2945 = vmatprep.subr.bf16.mxu0 0
    %2946 = vmatpush2.bf16.msra.mxu0 %v2847
    %2947 = vmatprep.subr.bf16.mxu0 0
    %2948 = vmatpush2.bf16.msra.mxu0 %v2846
    %2949 = vmatprep.subr.bf16.mxu0 0
    %2950 = vmatpush2.bf16.msra.mxu0 %v2845
    %2951 = vmatprep.subr.bf16.mxu0 0
    %2952 = vmatpush2.bf16.msra.mxu0 %v2844
    %2953 = vmatprep.subr.bf16.mxu0 0
    %2954 = vmatpush2.bf16.msra.mxu0 %v2843
    %2955 = vmatprep.mubr.bf16.mxu0 %v2619
    %2956 = vmatmul.mubr.bf16.gmra.mxu0 %v2618
    %v2957 = vpop.f32.mrf.mxu0
    %v2958 = vadd.f32 %v2918, %v2957
    %v2959 = vpop.f32.mrf.mxu0
    %v2960 = vpop.f32.mrf.mxu0
    %v2961 = vpop.f32.mrf.mxu0
    %2962 = vdwg.mxu0
    %2963 = vmax.xlane.f32.xlu0 %v2958
    %v2964 = vpop.xlane.xlu0 %2963
    %v2965 = vsub.f32 %v2958, %v2964
    %v2966 = vmul.f32 %v2965, 1.442695
    %v2967 = vpow.pop %v2966
    %2968 = vadd.xlane.f32.xlu0 %v2967
    %v2969 = vpop.xlane.xlu0 %2968
    %v2970 = vlog2.pop %v2969
    %v2971 = vmul.f32 %v2970, 0.6931472
    %v2972 = vsub.f32 %v2965, %v2971
    %2973 = vst [vmem:[#allocation11] sm:$0xff] %v2972
    // Predicated region
    $region50: #{tpu_custom_call.1} parent=1 // pred_check
      _
    $region51: #{tpu_custom_call.1} parent=1 // pred_check_branch
      %2975 = sbr.rel (0) target = $region53
    $region52: #{tpu_custom_call.1} parent=1 // pred_region
      %s2977 = ssub.s32 128, 128
      %2978 = vsyncadd [#allocation4], %s2977
      %s2980 = sshll.u32 [#allocation11], 4
      %s2981 = int_to_ptr.vmem [resolvable:$true] %s2980
      %2983 = dma.vmem_to_hbm [thread:$0]  %s2981, 128, %s7, [#allocation4]
    $region53: #{tpu_custom_call.1} parent=1 // pred_fallthru
      _
    // Predicated region
    $region54: #{tpu_custom_call.1} parent=1 // pred_check
      _
    $region55: #{tpu_custom_call.1} parent=1 // pred_check_branch
      %2985 = sbr.rel (0) target = $region57
    $region56: #{tpu_custom_call.1} parent=1 // pred_region
      %2986 = dma.done [#allocation4], 128
    $region57: #{tpu_custom_call.1} parent=1 // pred_fallthru
      _
    %2987 = vsyncpa [#allocation3], 1
    %2988 = vsyncpa [#allocation6], 1
    %2989 = vsyncpa [#allocation9], 1
    %2990 = vsyncpa [#allocation4], 1

</llo_original>
